<compile_context>
chip_gen: v5e
topology: v5e:2x2
jax: 0.10.0
libtpu: 0.0.40
codegen_flags: <defaults>
</compile_context>

<pallas_src>
import math
import jax
import jax.numpy as jnp
from jax.experimental import pallas as pl
from jax.experimental.pallas import tpu as pltpu


def _round_up(n, m):
    return ((n + m - 1) // m) * m


def mlp_kernel(x_ref, w1_ref, b1_ref, w2_ref, b2_ref, w3_ref, b3_ref, o_ref):
    # Fused 3-layer MLP on one batch tile.
    # x arrives f32 and is cast to bf16 in-register (VPU) just before the first dot;
    # all dots accumulate in f32 on the MXU; bias add + ReLU run on the f32 accumulator.
    # NOTE: h1/h2 are rounded to bf16 before the next dot (MXU bf16 inputs); a strictly
    # fp32 PyTorch MLP keeps them f32 — difference is small and covered by the tolerance.
    x = x_ref[...].astype(w1_ref.dtype)
    h1 = jnp.dot(x, w1_ref[...], preferred_element_type=jnp.float32)
    h1 = jnp.maximum(h1 + b1_ref[...], 0.0)

    h2 = jnp.dot(h1.astype(w2_ref.dtype), w2_ref[...],
                 preferred_element_type=jnp.float32)
    h2 = jnp.maximum(h2 + b2_ref[...], 0.0)

    h3 = jnp.dot(h2.astype(w3_ref.dtype), w3_ref[...],
                 preferred_element_type=jnp.float32)
    o_ref[...] = (h3 + b3_ref[...]).astype(o_ref.dtype)


def prepare_params(params, *, compute_dtype=jnp.bfloat16):
    """Pad weights to lane-dense (multiple-of-128) shapes and cast to bf16 ONCE.

    Call at init time and reuse for every forward; doing this per call costs an extra
    full HBM read+write of all weights before the (DMA-bound) kernel even runs.
    Zero padding is inert: padded x lanes hit zero w1 rows, padded hidden lanes are
    relu(0+0)=0 and hit zero rows of the next weight, padded output lanes are sliced off.
    """
    w1, b1 = params["w1"], params["b1"]
    w2, b2 = params["w2"], params["b2"]
    w3, b3 = params["w3"], params["b3"]
    in_dim, H1 = w1.shape
    H2, out_dim = w2.shape[1], w3.shape[1]

    Kp = _round_up(in_dim, 128)
    H1p = _round_up(H1, 128)       # 512 -> 512
    H2p = _round_up(H2, 128)       # 64  -> 128
    Np = _round_up(out_dim, 128)   # e.g. 10 -> 128

    return {
        "w1": jnp.zeros((Kp, H1p), compute_dtype).at[:in_dim, :H1].set(w1.astype(compute_dtype)),
        "b1": jnp.zeros((1, H1p), jnp.float32).at[:, :H1].set(b1),
        "w2": jnp.zeros((H1p, H2p), compute_dtype).at[:H1, :H2].set(w2.astype(compute_dtype)),
        "b2": jnp.zeros((1, H2p), jnp.float32).at[:, :H2].set(b2),
        "w3": jnp.zeros((H2p, Np), compute_dtype).at[:H2, :out_dim].set(w3.astype(compute_dtype)),
        "b3": jnp.zeros((1, Np), jnp.float32).at[:, :out_dim].set(b3),
        "in_dim": in_dim, "out_dim": out_dim,
        "Kp": Kp, "H1p": H1p, "H2p": H2p, "Np": Np,
    }


def _pick_batch_tile(B):
    """Fewer, fatter batch tiles: multiples of 256 at large B (256x256 MXU, amortize
    per-step overhead), >=2 grid tiles once B>=512 (v7x has 2 TensorCores), and at
    small B a single 16-row-aligned tile (bf16 packs 16 rows per vreg sublane group)."""
    if B >= 512:
        return min(1024, 256 * max(1, (B // 2) // 256))
    if B >= 256:
        return 256
    return _round_up(max(B, 16), 16)


def mlp_forward(x_nchw, pp):
    """x_nchw: (B, C, H, W) float32. pp: output of prepare_params (padded bf16 weights)."""
    B = x_nchw.shape[0]
    x2d = x_nchw.reshape(B, -1).astype(jnp.float32)   # nn.Flatten(start_dim=1), row-major
    in_dim, out_dim = pp["in_dim"], pp["out_dim"]
    Kp, H1p, H2p, Np = pp["Kp"], pp["H1p"], pp["H2p"], pp["Np"]
    assert x2d.shape[1] == in_dim

    tm = _pick_batch_tile(B)
    Bp = _round_up(B, tm)

    # Pad x only when ragged (batch not a tile multiple, or in_dim not lane-dense);
    # otherwise the kernel streams x straight from HBM with no extra wrapper pass.
    if Bp != B or Kp != in_dim:
        xp = jnp.zeros((Bp, Kp), jnp.float32).at[:B, :in_dim].set(x2d)
    else:
        xp = x2d

    grid = (Bp // tm,)

    # VMEM budget: double-buffered x/out tiles + resident (but still double-allocated)
    # bf16 weights + f32 intermediates, with 2x headroom, capped under v7x's 64 MiB.
    # TODO(synk): for very large flatten dims (Kp >~ 12-16K) w1 no longer fits VMEM;
    # add a trailing "arbitrary" K-tiling grid axis with an f32 acc scratch and
    # pl.when init/finalize for layer 1.
    vmem_bytes = (
        2 * tm * Kp * 4                                   # x tile (f32), double-buffered
        + 2 * tm * Np * 4                                 # out tile (f32), double-buffered
        + 2 * (Kp * H1p + H1p * H2p + H2p * Np) * 2       # bf16 weights
        + 2 * (H1p + H2p + Np) * 4                        # biases
        + tm * (H1p + H2p + Np) * 4                       # f32 intermediates
    )
    vmem_limit = min(max(_round_up(2 * vmem_bytes, 1 << 20), 16 << 20), 56 << 20)

    out_padded = pl.pallas_call(
        mlp_kernel,
        out_shape=jax.ShapeDtypeStruct((Bp, Np), jnp.float32),
        grid=grid,
        in_specs=[
            # x: tiled over batch -> pipelined DMA overlaps with MXU work.
            pl.BlockSpec((tm, Kp), lambda i: (i, 0)),
            # Weights / biases: constant index_map -> fetched once, VMEM-resident.
            pl.BlockSpec((Kp, H1p), lambda i: (0, 0)),
            pl.BlockSpec((1, H1p), lambda i: (0, 0)),
            pl.BlockSpec((H1p, H2p), lambda i: (0, 0)),
            pl.BlockSpec((1, H2p), lambda i: (0, 0)),
            pl.BlockSpec((H2p, Np), lambda i: (0, 0)),
            pl.BlockSpec((1, Np), lambda i: (0, 0)),
        ],
        out_specs=pl.BlockSpec((tm, Np), lambda i: (i, 0)),
        compiler_params=pltpu.CompilerParams(
            # Batch tiles are independent -> v7x's two TensorCores split the grid.
            dimension_semantics=("parallel",),
            vmem_limit_bytes=vmem_limit,
        ),
    )(xp, pp["w1"], pp["b1"], pp["w2"], pp["b2"], pp["w3"], pp["b3"])

    return out_padded[:B, :out_dim]


def init_params(key, in_dim, out_dim):
    """Deterministic init mimicking PyTorch nn.Linear default (U[-1/sqrt(fan_in), +])."""
    def linear(key, fan_in, fan_out):
        kw, kb = jax.random.split(key)
        bound = 1.0 / math.sqrt(fan_in)
        # stored as (in, out) so the kernel does x @ W + b
        w = jax.random.uniform(kw, (fan_in, fan_out), jnp.float32, -bound, bound)
        b = jax.random.uniform(kb, (1, fan_out), jnp.float32, -bound, bound)
        return w, b

    k1, k2, k3 = jax.random.split(key, 3)
    w1, b1 = linear(k1, in_dim, 512)
    w2, b2 = linear(k2, 512, 64)
    w3, b3 = linear(k3, 64, out_dim)
    return {"w1": w1, "b1": b1, "w2": w2, "b2": b2, "w3": w3, "b3": b3}


if __name__ == "__main__":
    key = jax.random.PRNGKey(0)
    k_x, k_p = jax.random.split(key)

    # Small example: batch=2, channels=4, spatial=16x16 -> in_dim = 1024, out_dim = 10
    B, C, H, W = 2, 4, 16, 16
    in_dim = C * H * W
    out_dim = 10

    x = jax.random.normal(k_x, (B, C, H, W), jnp.float32)
    params = init_params(k_p, in_dim, out_dim)
    padded = prepare_params(params)          # pad/cast weights once, reuse every call

    out = mlp_forward(x, padded)
    jax.block_until_ready(out)
    assert out.shape == (B, out_dim)

    # Pure-JAX reference with the same bf16 rounding the kernel applies (f32 accumulation).
    def r(a):
        return a.astype(jnp.bfloat16).astype(jnp.float32)

    x2d = x.reshape(B, -1)
    ref = jnp.maximum(r(x2d) @ r(params["w1"]) + params["b1"], 0.0)
    ref = jnp.maximum(r(ref) @ r(params["w2"]) + params["b2"], 0.0)
    ref = r(ref) @ r(params["w3"]) + params["b3"]

    assert bool(jnp.allclose(out, ref, atol=3e-2, rtol=3e-2)), (
        float(jnp.max(jnp.abs(out - ref))))

    print("KERNEL_OK")
</pallas_src>

<mosaic_0001>
module attributes {stable_mosaic.version = 11 : i64} {
  func.func @mlp_kernel(%arg0: i32, %arg1: memref<16x1024xf32, #tpu.memory_space<vmem>>, %arg2: memref<1024x512xbf16, #tpu.memory_space<vmem>>, %arg3: memref<1x512xf32, #tpu.memory_space<vmem>>, %arg4: memref<512x128xbf16, #tpu.memory_space<vmem>>, %arg5: memref<1x128xf32, #tpu.memory_space<vmem>>, %arg6: memref<128x128xbf16, #tpu.memory_space<vmem>>, %arg7: memref<1x128xf32, #tpu.memory_space<vmem>>, %arg8: memref<16x128xf32, #tpu.memory_space<vmem>>) attributes {dimension_semantics = [#tpu.dimension_semantics<parallel>], iteration_bounds = array<i64: 1>, scalar_prefetch = 0 : i64, scratch_operands = 0 : i64, tpu.core_type = #tpu.core_type<tc>, window_params = [{transform_indices = @transform_0, window_bounds = array<i64: 16, 1024>}, {pipeline_mode = #tpu.pipeline_mode<synchronous>, transform_indices = @transform_1, window_bounds = array<i64: 1024, 512>}, {pipeline_mode = #tpu.pipeline_mode<synchronous>, transform_indices = @transform_2, window_bounds = array<i64: 1, 512>}, {pipeline_mode = #tpu.pipeline_mode<synchronous>, transform_indices = @transform_3, window_bounds = array<i64: 512, 128>}, {pipeline_mode = #tpu.pipeline_mode<synchronous>, transform_indices = @transform_4, window_bounds = array<i64: 1, 128>}, {pipeline_mode = #tpu.pipeline_mode<synchronous>, transform_indices = @transform_5, window_bounds = array<i64: 128, 128>}, {pipeline_mode = #tpu.pipeline_mode<synchronous>, transform_indices = @transform_6, window_bounds = array<i64: 1, 128>}, {transform_indices = @transform_7, window_bounds = array<i64: 16, 128>}]} {
    %c0 = arith.constant 0 : index
    %c0_0 = arith.constant 0 : index
    %0 = vector.load %arg1[%c0, %c0_0] : memref<16x1024xf32, #tpu.memory_space<vmem>>, vector<16x1024xf32>
    %1 = arith.truncf %0 : vector<16x1024xf32> to vector<16x1024xbf16>
    %c0_1 = arith.constant 0 : index
    %c0_2 = arith.constant 0 : index
    %2 = vector.load %arg2[%c0_1, %c0_2] : memref<1024x512xbf16, #tpu.memory_space<vmem>>, vector<1024x512xbf16>
    %cst = arith.constant dense<0.000000e+00> : vector<16x512xf32>
    %3 = tpu.matmul %1, %2, %cst {dimension_numbers = #tpu.dot_dimension_numbers<[1], [0], [0], [1], [0, 0, 1, 1], [], []>} : vector<16x1024xbf16>, vector<1024x512xbf16>, vector<16x512xf32> -> vector<16x512xf32>
    %c0_3 = arith.constant 0 : index
    %c0_4 = arith.constant 0 : index
    %4 = vector.load %arg3[%c0_3, %c0_4] : memref<1x512xf32, #tpu.memory_space<vmem>>, vector<1x512xf32>
    %5 = vector.broadcast %4 : vector<1x512xf32> to vector<16x512xf32>
    %6 = arith.addf %3, %5 : vector<16x512xf32>
    %cst_5 = arith.constant 0.000000e+00 : f32
    %7 = vector.broadcast %cst_5 : f32 to vector<16x512xf32>
    %8 = arith.maximumf %6, %7 : vector<16x512xf32>
    %9 = arith.truncf %8 : vector<16x512xf32> to vector<16x512xbf16>
    %c0_6 = arith.constant 0 : index
    %c0_7 = arith.constant 0 : index
    %10 = vector.load %arg4[%c0_6, %c0_7] : memref<512x128xbf16, #tpu.memory_space<vmem>>, vector<512x128xbf16>
    %cst_8 = arith.constant dense<0.000000e+00> : vector<16x128xf32>
    %11 = tpu.matmul %9, %10, %cst_8 {dimension_numbers = #tpu.dot_dimension_numbers<[1], [0], [0], [1], [0, 0, 1, 1], [], []>} : vector<16x512xbf16>, vector<512x128xbf16>, vector<16x128xf32> -> vector<16x128xf32>
    %c0_9 = arith.constant 0 : index
    %c0_10 = arith.constant 0 : index
    %12 = vector.load %arg5[%c0_9, %c0_10] : memref<1x128xf32, #tpu.memory_space<vmem>>, vector<1x128xf32>
    %13 = vector.broadcast %12 : vector<1x128xf32> to vector<16x128xf32>
    %14 = arith.addf %11, %13 : vector<16x128xf32>
    %cst_11 = arith.constant 0.000000e+00 : f32
    %15 = vector.broadcast %cst_11 : f32 to vector<16x128xf32>
    %16 = arith.maximumf %14, %15 : vector<16x128xf32>
    %17 = arith.truncf %16 : vector<16x128xf32> to vector<16x128xbf16>
    %c0_12 = arith.constant 0 : index
    %c0_13 = arith.constant 0 : index
    %18 = vector.load %arg6[%c0_12, %c0_13] : memref<128x128xbf16, #tpu.memory_space<vmem>>, vector<128x128xbf16>
    %cst_14 = arith.constant dense<0.000000e+00> : vector<16x128xf32>
    %19 = tpu.matmul %17, %18, %cst_14 {dimension_numbers = #tpu.dot_dimension_numbers<[1], [0], [0], [1], [0, 0, 1, 1], [], []>} : vector<16x128xbf16>, vector<128x128xbf16>, vector<16x128xf32> -> vector<16x128xf32>
    %c0_15 = arith.constant 0 : index
    %c0_16 = arith.constant 0 : index
    %20 = vector.load %arg7[%c0_15, %c0_16] : memref<1x128xf32, #tpu.memory_space<vmem>>, vector<1x128xf32>
    %21 = vector.broadcast %20 : vector<1x128xf32> to vector<16x128xf32>
    %22 = arith.addf %19, %21 : vector<16x128xf32>
    %c0_17 = arith.constant 0 : index
    %c0_18 = arith.constant 0 : index
    %23 = vector.load %arg8[%c0_17, %c0_18] : memref<16x128xf32, #tpu.memory_space<vmem>>, vector<16x128xf32>
    tpu.vector_store %arg8[%c0_17, %c0_18], %22 {strides = array<i32>} : memref<16x128xf32, #tpu.memory_space<vmem>>, vector<16x128xf32>,
    return
  }
  func.func @transform_0(%arg0: i32) -> (i32, i32) {
    %c0_i32 = arith.constant 0 : i32
    %c0_i32_0 = arith.constant 0 : i32
    return %arg0, %c0_i32 : i32, i32
  }
  func.func @transform_1(%arg0: i32) -> (i32, i32) {
    %c0_i32 = arith.constant 0 : i32
    %c0_i32_0 = arith.constant 0 : i32
    %c0_i32_1 = arith.constant 0 : i32
    return %c0_i32, %c0_i32_0 : i32, i32
  }
  func.func @transform_2(%arg0: i32) -> (i32, i32) {
    %c0_i32 = arith.constant 0 : i32
    %c0_i32_0 = arith.constant 0 : i32
    %c0_i32_1 = arith.constant 0 : i32
    return %c0_i32, %c0_i32_0 : i32, i32
  }
  func.func @transform_3(%arg0: i32) -> (i32, i32) {
    %c0_i32 = arith.constant 0 : i32
    %c0_i32_0 = arith.constant 0 : i32
    %c0_i32_1 = arith.constant 0 : i32
    return %c0_i32, %c0_i32_0 : i32, i32
  }
  func.func @transform_4(%arg0: i32) -> (i32, i32) {
    %c0_i32 = arith.constant 0 : i32
    %c0_i32_0 = arith.constant 0 : i32
    %c0_i32_1 = arith.constant 0 : i32
    return %c0_i32, %c0_i32_0 : i32, i32
  }
  func.func @transform_5(%arg0: i32) -> (i32, i32) {
    %c0_i32 = arith.constant 0 : i32
    %c0_i32_0 = arith.constant 0 : i32
    %c0_i32_1 = arith.constant 0 : i32
    return %c0_i32, %c0_i32_0 : i32, i32
  }
  func.func @transform_6(%arg0: i32) -> (i32, i32) {
    %c0_i32 = arith.constant 0 : i32
    %c0_i32_0 = arith.constant 0 : i32
    %c0_i32_1 = arith.constant 0 : i32
    return %c0_i32, %c0_i32_0 : i32, i32
  }
  func.func @transform_7(%arg0: i32) -> (i32, i32) {
    %c0_i32 = arith.constant 0 : i32
    %c0_i32_0 = arith.constant 0 : i32
    return %arg0, %c0_i32 : i32, i32
  }
}

</mosaic_0001>

<llo_original>
// kernel: tpu_custom_call.1
$region0: #{tpu_custom_call.1}
  #allocation0 [shape = 'u32[]', space=smem, size = 0x4, offset = 0x4, fixed_abs, tag = 'smem constant byte address 0x4 - core index']
  #allocation1 [shape = 'u32[72,128]{1,0:T(1,128)}', space=vmem, size = 0x9000, scoped, tag = 'internal scratch']
  %s0 = inlined_call_operand.hbm [shape: f32[16,1024], index: 0, kind: input, shape index: {}]
  %s1 = inlined_call_operand.hbm [shape: bf16[1024,512], index: 1, kind: input, shape index: {}]
  %s2 = inlined_call_operand.hbm [shape: f32[1,512], index: 2, kind: input, shape index: {}]
  %s3 = inlined_call_operand.hbm [shape: bf16[512,128], index: 3, kind: input, shape index: {}]
  %s4 = inlined_call_operand.vmem [shape: f32[1,128], index: 4, kind: input, shape index: {}]
  %s5 = inlined_call_operand.hbm [shape: bf16[128,128], index: 5, kind: input, shape index: {}]
  %s6 = inlined_call_operand.vmem [shape: f32[1,128], index: 6, kind: input, shape index: {}]
  %s7 = inlined_call_operand.hbm [shape: f32[16,128], index: 7, kind: output, shape index: {}]
  %s8 = sld [smem:[#allocation0]]
  $region58: #{tpu_custom_call.1} parent=0
    _
  %s10 = ssub.s32 1, %s8
  %s11 = scalar_select 0, %s10, %s8
  $region1: #{tpu_custom_call.1} parent=0
    #allocation2 [shape = 'u8[65536]{0}', space=vmem, size = 0x10000, scoped, tag = 'input window, operand 0, single buffered']
    #allocation3 [shape = 's32[1]{0}', space=sflag, size = 0x4, scoped, tag = 'scoped memory for tpu_custom_call.1']
    #allocation4 [shape = 's32[1]{0}', space=sflag, size = 0x4, scoped, tag = 'scoped memory for tpu_custom_call.1']
    #allocation5 [shape = 'u8[1048576]{0}', space=vmem, size = 0x100000, scoped, tag = 'input window, operand 1, single buffered']
    #allocation6 [shape = 's32[1]{0}', space=sflag, size = 0x4, scoped, tag = 'scoped memory for tpu_custom_call.1']
    #allocation7 [shape = 'u8[2048]{0}', space=vmem, size = 0x800, scoped, tag = 'input window, operand 2, single buffered']
    #allocation8 [shape = 'u8[131072]{0}', space=vmem, size = 0x20000, scoped, tag = 'input window, operand 3, single buffered']
    #allocation9 [shape = 's32[1]{0}', space=sflag, size = 0x4, scoped, tag = 'scoped memory for tpu_custom_call.1']
    #allocation10 [shape = 'u8[32768]{0}', space=vmem, size = 0x8000, scoped, tag = 'input window, operand 5, single buffered']
    #allocation11 [shape = 'u8[8192]{0}', space=vmem, size = 0x2000, scoped, tag = 'output window, operand 0, single buffered']
    %12 = vsyncpa [#allocation3], 0
    %13 = vsyncpa [#allocation6], 0
    %14 = vsyncpa [#allocation9], 0
    %15 = vsyncpa [#allocation4], 0
    // Predicated region
    $region2: #{tpu_custom_call.1} parent=1 // pred_check
      _
    $region3: #{tpu_custom_call.1} parent=1 // pred_check_branch
      %17 = sbr.rel (0) target = $region5
    $region4: #{tpu_custom_call.1} parent=1 // pred_region
      %19 = vsyncadd [#allocation3], 0
      %s20 = sshll.u32 %s0, 4
      %s21 = int_to_ptr.hbm [resolvable:$true] %s20
      %s22 = sshll.u32 [#allocation2], 4
      %s23 = int_to_ptr.vmem [resolvable:$true] %s22
      %28 = dma.hbm_to_vmem [thread:$0]  %s21, 2048, %s23, [#allocation3], 1024, 1024, 64
    $region5: #{tpu_custom_call.1} parent=1 // pred_fallthru
      _
    // Predicated region
    $region6: #{tpu_custom_call.1} parent=1 // pred_check
      _
    $region7: #{tpu_custom_call.1} parent=1 // pred_check_branch
      %30 = sbr.rel (0) target = $region9
    $region8: #{tpu_custom_call.1} parent=1 // pred_region
      %32 = vsyncadd [#allocation6], 0
      %s33 = sshll.u32 %s1, 4
      %s34 = int_to_ptr.hbm [resolvable:$true] %s33
      %s35 = sshll.u32 [#allocation5], 4
      %s36 = int_to_ptr.vmem [resolvable:$true] %s35
      %41 = dma.hbm_to_vmem [thread:$0]  %s34, 32768, %s36, [#allocation6], 256, 256, 16
    $region9: #{tpu_custom_call.1} parent=1 // pred_fallthru
      _
    // Predicated region
    $region10: #{tpu_custom_call.1} parent=1 // pred_check
      _
    $region11: #{tpu_custom_call.1} parent=1 // pred_check_branch
      %43 = sbr.rel (0) target = $region13
    $region12: #{tpu_custom_call.1} parent=1 // pred_region
      %45 = vsyncadd [#allocation6], 0
      %s47 = sshll.u32 %s2, 4
      %s48 = int_to_ptr.hbm [resolvable:$true] %s47
      %s49 = sshll.u32 [#allocation7], 4
      %s50 = int_to_ptr.vmem [resolvable:$true] %s49
      %52 = dma.hbm_to_vmem [thread:$0]  %s48, 64, %s50, [#allocation6]
    $region13: #{tpu_custom_call.1} parent=1 // pred_fallthru
      _
    // Predicated region
    $region14: #{tpu_custom_call.1} parent=1 // pred_check
      _
    $region15: #{tpu_custom_call.1} parent=1 // pred_check_branch
      %54 = sbr.rel (0) target = $region17
    $region16: #{tpu_custom_call.1} parent=1 // pred_region
      %56 = vsyncadd [#allocation9], 0
      %s57 = sshll.u32 %s3, 4
      %s58 = int_to_ptr.hbm [resolvable:$true] %s57
      %s59 = sshll.u32 [#allocation8], 4
      %s60 = int_to_ptr.vmem [resolvable:$true] %s59
      %65 = dma.hbm_to_vmem [thread:$0]  %s58, 4096, %s60, [#allocation9], 64, 64, 4
    $region17: #{tpu_custom_call.1} parent=1 // pred_fallthru
      _
    // Predicated region
    $region18: #{tpu_custom_call.1} parent=1 // pred_check
      _
    $region19: #{tpu_custom_call.1} parent=1 // pred_check_branch
      %67 = sbr.rel (0) target = $region21
    $region20: #{tpu_custom_call.1} parent=1 // pred_region
      _
    $region21: #{tpu_custom_call.1} parent=1 // pred_fallthru
      _
    // Predicated region
    $region22: #{tpu_custom_call.1} parent=1 // pred_check
      _
    $region23: #{tpu_custom_call.1} parent=1 // pred_check_branch
      %69 = sbr.rel (0) target = $region25
    $region24: #{tpu_custom_call.1} parent=1 // pred_region
      %71 = vsyncadd [#allocation9], 0
      %s72 = sshll.u32 %s5, 4
      %s73 = int_to_ptr.hbm [resolvable:$true] %s72
      %s74 = sshll.u32 [#allocation10], 4
      %s75 = int_to_ptr.vmem [resolvable:$true] %s74
      %80 = dma.hbm_to_vmem [thread:$0]  %s73, 1024, %s75, [#allocation9], 64, 64, 4
    $region25: #{tpu_custom_call.1} parent=1 // pred_fallthru
      _
    // Predicated region
    $region26: #{tpu_custom_call.1} parent=1 // pred_check
      _
    $region27: #{tpu_custom_call.1} parent=1 // pred_check_branch
      %82 = sbr.rel (0) target = $region29
    $region28: #{tpu_custom_call.1} parent=1 // pred_region
      _
    $region29: #{tpu_custom_call.1} parent=1 // pred_fallthru
      _
    // Predicated region
    $region30: #{tpu_custom_call.1} parent=1 // pred_check
      _
    $region31: #{tpu_custom_call.1} parent=1 // pred_check_branch
      %84 = sbr.rel (0) target = $region33
    $region32: #{tpu_custom_call.1} parent=1 // pred_region
      %86 = dma.done [#allocation3], 2048
    $region33: #{tpu_custom_call.1} parent=1 // pred_fallthru
      _
    // Predicated region
    $region34: #{tpu_custom_call.1} parent=1 // pred_check
      _
    $region35: #{tpu_custom_call.1} parent=1 // pred_check_branch
      %88 = sbr.rel (0) target = $region37
    $region36: #{tpu_custom_call.1} parent=1 // pred_region
      %90 = dma.done [#allocation6], 32768
    $region37: #{tpu_custom_call.1} parent=1 // pred_fallthru
      _
    // Predicated region
    $region38: #{tpu_custom_call.1} parent=1 // pred_check
      _
    $region39: #{tpu_custom_call.1} parent=1 // pred_check_branch
      %92 = sbr.rel (0) target = $region41
    $region40: #{tpu_custom_call.1} parent=1 // pred_region
      %94 = dma.done [#allocation6], 64
    $region41: #{tpu_custom_call.1} parent=1 // pred_fallthru
      _
    // Predicated region
    $region42: #{tpu_custom_call.1} parent=1 // pred_check
      _
    $region43: #{tpu_custom_call.1} parent=1 // pred_check_branch
      %96 = sbr.rel (0) target = $region45
    $region44: #{tpu_custom_call.1} parent=1 // pred_region
      %98 = dma.done [#allocation9], 4096
    $region45: #{tpu_custom_call.1} parent=1 // pred_fallthru
      _
    // Predicated region
    $region46: #{tpu_custom_call.1} parent=1 // pred_check
      _
    $region47: #{tpu_custom_call.1} parent=1 // pred_check_branch
      %100 = sbr.rel (0) target = $region49
    $region48: #{tpu_custom_call.1} parent=1 // pred_region
      %102 = dma.done [#allocation9], 1024
    $region49: #{tpu_custom_call.1} parent=1 // pred_fallthru
      _
    %v103 = vld [vmem:[#allocation2] sm:$0xff]
    %v104 = vld [vmem:[#allocation2 + $0x8] sm:$0xff]
    %v105 = vld [vmem:[#allocation2 + $0x10] sm:$0xff]
    %v106 = vld [vmem:[#allocation2 + $0x18] sm:$0xff]
    %v107 = vld [vmem:[#allocation2 + $0x20] sm:$0xff]
    %v108 = vld [vmem:[#allocation2 + $0x28] sm:$0xff]
    %v109 = vld [vmem:[#allocation2 + $0x30] sm:$0xff]
    %v110 = vld [vmem:[#allocation2 + $0x38] sm:$0xff]
    %v111 = vld [vmem:[#allocation2 + $0x40] sm:$0xff]
    %v112 = vld [vmem:[#allocation2 + $0x48] sm:$0xff]
    %v113 = vld [vmem:[#allocation2 + $0x50] sm:$0xff]
    %v114 = vld [vmem:[#allocation2 + $0x58] sm:$0xff]
    %v115 = vld [vmem:[#allocation2 + $0x60] sm:$0xff]
    %v116 = vld [vmem:[#allocation2 + $0x68] sm:$0xff]
    %v117 = vld [vmem:[#allocation2 + $0x70] sm:$0xff]
    %v118 = vld [vmem:[#allocation2 + $0x78] sm:$0xff]
    %v119 = vpack.c.bf16 %v111, %v103
    %v120 = vpack.c.bf16 %v112, %v104
    %v121 = vpack.c.bf16 %v113, %v105
    %v122 = vpack.c.bf16 %v114, %v106
    %v123 = vpack.c.bf16 %v115, %v107
    %v124 = vpack.c.bf16 %v116, %v108
    %v125 = vpack.c.bf16 %v117, %v109
    %v126 = vpack.c.bf16 %v118, %v110
    %v127 = vld [vmem:[#allocation5] sm:$0xff]
    %v128 = vld [vmem:[#allocation5 + $0x8] sm:$0xff]
    %v129 = vld [vmem:[#allocation5 + $0x10] sm:$0xff]
    %v130 = vld [vmem:[#allocation5 + $0x18] sm:$0xff]
    %v131 = vld [vmem:[#allocation5 + $0x20] sm:$0xff]
    %v132 = vld [vmem:[#allocation5 + $0x28] sm:$0xff]
    %v133 = vld [vmem:[#allocation5 + $0x30] sm:$0xff]
    %v134 = vld [vmem:[#allocation5 + $0x38] sm:$0xff]
    %v135 = vld [vmem:[#allocation5 + $0x40] sm:$0xff]
    %v136 = vld [vmem:[#allocation5 + $0x48] sm:$0xff]
    %v137 = vld [vmem:[#allocation5 + $0x50] sm:$0xff]
    %v138 = vld [vmem:[#allocation5 + $0x58] sm:$0xff]
    %v139 = vld [vmem:[#allocation5 + $0x60] sm:$0xff]
    %v140 = vld [vmem:[#allocation5 + $0x68] sm:$0xff]
    %v141 = vld [vmem:[#allocation5 + $0x70] sm:$0xff]
    %v142 = vld [vmem:[#allocation5 + $0x78] sm:$0xff]
    %v143 = vld [vmem:[#allocation5 + $0x80] sm:$0xff]
    %v144 = vld [vmem:[#allocation5 + $0x88] sm:$0xff]
    %v145 = vld [vmem:[#allocation5 + $0x90] sm:$0xff]
    %v146 = vld [vmem:[#allocation5 + $0x98] sm:$0xff]
    %v147 = vld [vmem:[#allocation5 + $0xa0] sm:$0xff]
    %v148 = vld [vmem:[#allocation5 + $0xa8] sm:$0xff]
    %v149 = vld [vmem:[#allocation5 + $0xb0] sm:$0xff]
    %v150 = vld [vmem:[#allocation5 + $0xb8] sm:$0xff]
    %v151 = vld [vmem:[#allocation5 + $0xc0] sm:$0xff]
    %v152 = vld [vmem:[#allocation5 + $0xc8] sm:$0xff]
    %v153 = vld [vmem:[#allocation5 + $0xd0] sm:$0xff]
    %v154 = vld [vmem:[#allocation5 + $0xd8] sm:$0xff]
    %v155 = vld [vmem:[#allocation5 + $0xe0] sm:$0xff]
    %v156 = vld [vmem:[#allocation5 + $0xe8] sm:$0xff]
    %v157 = vld [vmem:[#allocation5 + $0xf0] sm:$0xff]
    %v158 = vld [vmem:[#allocation5 + $0xf8] sm:$0xff]
    %v159 = vld [vmem:[#allocation5 + $0x100] sm:$0xff]
    %v160 = vld [vmem:[#allocation5 + $0x108] sm:$0xff]
    %v161 = vld [vmem:[#allocation5 + $0x110] sm:$0xff]
    %v162 = vld [vmem:[#allocation5 + $0x118] sm:$0xff]
    %v163 = vld [vmem:[#allocation5 + $0x120] sm:$0xff]
    %v164 = vld [vmem:[#allocation5 + $0x128] sm:$0xff]
    %v165 = vld [vmem:[#allocation5 + $0x130] sm:$0xff]
    %v166 = vld [vmem:[#allocation5 + $0x138] sm:$0xff]
    %v167 = vld [vmem:[#allocation5 + $0x140] sm:$0xff]
    %v168 = vld [vmem:[#allocation5 + $0x148] sm:$0xff]
    %v169 = vld [vmem:[#allocation5 + $0x150] sm:$0xff]
    %v170 = vld [vmem:[#allocation5 + $0x158] sm:$0xff]
    %v171 = vld [vmem:[#allocation5 + $0x160] sm:$0xff]
    %v172 = vld [vmem:[#allocation5 + $0x168] sm:$0xff]
    %v173 = vld [vmem:[#allocation5 + $0x170] sm:$0xff]
    %v174 = vld [vmem:[#allocation5 + $0x178] sm:$0xff]
    %v175 = vld [vmem:[#allocation5 + $0x180] sm:$0xff]
    %v176 = vld [vmem:[#allocation5 + $0x188] sm:$0xff]
    %v177 = vld [vmem:[#allocation5 + $0x190] sm:$0xff]
    %v178 = vld [vmem:[#allocation5 + $0x198] sm:$0xff]
    %v179 = vld [vmem:[#allocation5 + $0x1a0] sm:$0xff]
    %v180 = vld [vmem:[#allocation5 + $0x1a8] sm:$0xff]
    %v181 = vld [vmem:[#allocation5 + $0x1b0] sm:$0xff]
    %v182 = vld [vmem:[#allocation5 + $0x1b8] sm:$0xff]
    %v183 = vld [vmem:[#allocation5 + $0x1c0] sm:$0xff]
    %v184 = vld [vmem:[#allocation5 + $0x1c8] sm:$0xff]
    %v185 = vld [vmem:[#allocation5 + $0x1d0] sm:$0xff]
    %v186 = vld [vmem:[#allocation5 + $0x1d8] sm:$0xff]
    %v187 = vld [vmem:[#allocation5 + $0x1e0] sm:$0xff]
    %v188 = vld [vmem:[#allocation5 + $0x1e8] sm:$0xff]
    %v189 = vld [vmem:[#allocation5 + $0x1f0] sm:$0xff]
    %v190 = vld [vmem:[#allocation5 + $0x1f8] sm:$0xff]
    %v191 = vld [vmem:[#allocation5 + $0x200] sm:$0xff]
    %v192 = vld [vmem:[#allocation5 + $0x208] sm:$0xff]
    %v193 = vld [vmem:[#allocation5 + $0x210] sm:$0xff]
    %v194 = vld [vmem:[#allocation5 + $0x218] sm:$0xff]
    %v195 = vld [vmem:[#allocation5 + $0x220] sm:$0xff]
    %v196 = vld [vmem:[#allocation5 + $0x228] sm:$0xff]
    %v197 = vld [vmem:[#allocation5 + $0x230] sm:$0xff]
    %v198 = vld [vmem:[#allocation5 + $0x238] sm:$0xff]
    %v199 = vld [vmem:[#allocation5 + $0x240] sm:$0xff]
    %v200 = vld [vmem:[#allocation5 + $0x248] sm:$0xff]
    %v201 = vld [vmem:[#allocation5 + $0x250] sm:$0xff]
    %v202 = vld [vmem:[#allocation5 + $0x258] sm:$0xff]
    %v203 = vld [vmem:[#allocation5 + $0x260] sm:$0xff]
    %v204 = vld [vmem:[#allocation5 + $0x268] sm:$0xff]
    %v205 = vld [vmem:[#allocation5 + $0x270] sm:$0xff]
    %v206 = vld [vmem:[#allocation5 + $0x278] sm:$0xff]
    %v207 = vld [vmem:[#allocation5 + $0x280] sm:$0xff]
    %v208 = vld [vmem:[#allocation5 + $0x288] sm:$0xff]
    %v209 = vld [vmem:[#allocation5 + $0x290] sm:$0xff]
    %v210 = vld [vmem:[#allocation5 + $0x298] sm:$0xff]
    %v211 = vld [vmem:[#allocation5 + $0x2a0] sm:$0xff]
    %v212 = vld [vmem:[#allocation5 + $0x2a8] sm:$0xff]
    %v213 = vld [vmem:[#allocation5 + $0x2b0] sm:$0xff]
    %v214 = vld [vmem:[#allocation5 + $0x2b8] sm:$0xff]
    %v215 = vld [vmem:[#allocation5 + $0x2c0] sm:$0xff]
    %v216 = vld [vmem:[#allocation5 + $0x2c8] sm:$0xff]
    %v217 = vld [vmem:[#allocation5 + $0x2d0] sm:$0xff]
    %v218 = vld [vmem:[#allocation5 + $0x2d8] sm:$0xff]
    %v219 = vld [vmem:[#allocation5 + $0x2e0] sm:$0xff]
    %v220 = vld [vmem:[#allocation5 + $0x2e8] sm:$0xff]
    %v221 = vld [vmem:[#allocation5 + $0x2f0] sm:$0xff]
    %v222 = vld [vmem:[#allocation5 + $0x2f8] sm:$0xff]
    %v223 = vld [vmem:[#allocation5 + $0x300] sm:$0xff]
    %v224 = vld [vmem:[#allocation5 + $0x308] sm:$0xff]
    %v225 = vld [vmem:[#allocation5 + $0x310] sm:$0xff]
    %v226 = vld [vmem:[#allocation5 + $0x318] sm:$0xff]
    %v227 = vld [vmem:[#allocation5 + $0x320] sm:$0xff]
    %v228 = vld [vmem:[#allocation5 + $0x328] sm:$0xff]
    %v229 = vld [vmem:[#allocation5 + $0x330] sm:$0xff]
    %v230 = vld [vmem:[#allocation5 + $0x338] sm:$0xff]
    %v231 = vld [vmem:[#allocation5 + $0x340] sm:$0xff]
    %v232 = vld [vmem:[#allocation5 + $0x348] sm:$0xff]
    %v233 = vld [vmem:[#allocation5 + $0x350] sm:$0xff]
    %v234 = vld [vmem:[#allocation5 + $0x358] sm:$0xff]
    %v235 = vld [vmem:[#allocation5 + $0x360] sm:$0xff]
    %v236 = vld [vmem:[#allocation5 + $0x368] sm:$0xff]
    %v237 = vld [vmem:[#allocation5 + $0x370] sm:$0xff]
    %v238 = vld [vmem:[#allocation5 + $0x378] sm:$0xff]
    %v239 = vld [vmem:[#allocation5 + $0x380] sm:$0xff]
    %v240 = vld [vmem:[#allocation5 + $0x388] sm:$0xff]
    %v241 = vld [vmem:[#allocation5 + $0x390] sm:$0xff]
    %v242 = vld [vmem:[#allocation5 + $0x398] sm:$0xff]
    %v243 = vld [vmem:[#allocation5 + $0x3a0] sm:$0xff]
    %v244 = vld [vmem:[#allocation5 + $0x3a8] sm:$0xff]
    %v245 = vld [vmem:[#allocation5 + $0x3b0] sm:$0xff]
    %v246 = vld [vmem:[#allocation5 + $0x3b8] sm:$0xff]
    %v247 = vld [vmem:[#allocation5 + $0x3c0] sm:$0xff]
    %v248 = vld [vmem:[#allocation5 + $0x3c8] sm:$0xff]
    %v249 = vld [vmem:[#allocation5 + $0x3d0] sm:$0xff]
    %v250 = vld [vmem:[#allocation5 + $0x3d8] sm:$0xff]
    %v251 = vld [vmem:[#allocation5 + $0x3e0] sm:$0xff]
    %v252 = vld [vmem:[#allocation5 + $0x3e8] sm:$0xff]
    %v253 = vld [vmem:[#allocation5 + $0x3f0] sm:$0xff]
    %v254 = vld [vmem:[#allocation5 + $0x3f8] sm:$0xff]
    %v255 = vld [vmem:[#allocation5 + $0x400] sm:$0xff]
    %v256 = vld [vmem:[#allocation5 + $0x408] sm:$0xff]
    %v257 = vld [vmem:[#allocation5 + $0x410] sm:$0xff]
    %v258 = vld [vmem:[#allocation5 + $0x418] sm:$0xff]
    %v259 = vld [vmem:[#allocation5 + $0x420] sm:$0xff]
    %v260 = vld [vmem:[#allocation5 + $0x428] sm:$0xff]
    %v261 = vld [vmem:[#allocation5 + $0x430] sm:$0xff]
    %v262 = vld [vmem:[#allocation5 + $0x438] sm:$0xff]
    %v263 = vld [vmem:[#allocation5 + $0x440] sm:$0xff]
    %v264 = vld [vmem:[#allocation5 + $0x448] sm:$0xff]
    %v265 = vld [vmem:[#allocation5 + $0x450] sm:$0xff]
    %v266 = vld [vmem:[#allocation5 + $0x458] sm:$0xff]
    %v267 = vld [vmem:[#allocation5 + $0x460] sm:$0xff]
    %v268 = vld [vmem:[#allocation5 + $0x468] sm:$0xff]
    %v269 = vld [vmem:[#allocation5 + $0x470] sm:$0xff]
    %v270 = vld [vmem:[#allocation5 + $0x478] sm:$0xff]
    %v271 = vld [vmem:[#allocation5 + $0x480] sm:$0xff]
    %v272 = vld [vmem:[#allocation5 + $0x488] sm:$0xff]
    %v273 = vld [vmem:[#allocation5 + $0x490] sm:$0xff]
    %v274 = vld [vmem:[#allocation5 + $0x498] sm:$0xff]
    %v275 = vld [vmem:[#allocation5 + $0x4a0] sm:$0xff]
    %v276 = vld [vmem:[#allocation5 + $0x4a8] sm:$0xff]
    %v277 = vld [vmem:[#allocation5 + $0x4b0] sm:$0xff]
    %v278 = vld [vmem:[#allocation5 + $0x4b8] sm:$0xff]
    %v279 = vld [vmem:[#allocation5 + $0x4c0] sm:$0xff]
    %v280 = vld [vmem:[#allocation5 + $0x4c8] sm:$0xff]
    %v281 = vld [vmem:[#allocation5 + $0x4d0] sm:$0xff]
    %v282 = vld [vmem:[#allocation5 + $0x4d8] sm:$0xff]
    %v283 = vld [vmem:[#allocation5 + $0x4e0] sm:$0xff]
    %v284 = vld [vmem:[#allocation5 + $0x4e8] sm:$0xff]
    %v285 = vld [vmem:[#allocation5 + $0x4f0] sm:$0xff]
    %v286 = vld [vmem:[#allocation5 + $0x4f8] sm:$0xff]
    %v287 = vld [vmem:[#allocation5 + $0x500] sm:$0xff]
    %v288 = vld [vmem:[#allocation5 + $0x508] sm:$0xff]
    %v289 = vld [vmem:[#allocation5 + $0x510] sm:$0xff]
    %v290 = vld [vmem:[#allocation5 + $0x518] sm:$0xff]
    %v291 = vld [vmem:[#allocation5 + $0x520] sm:$0xff]
    %v292 = vld [vmem:[#allocation5 + $0x528] sm:$0xff]
    %v293 = vld [vmem:[#allocation5 + $0x530] sm:$0xff]
    %v294 = vld [vmem:[#allocation5 + $0x538] sm:$0xff]
    %v295 = vld [vmem:[#allocation5 + $0x540] sm:$0xff]
    %v296 = vld [vmem:[#allocation5 + $0x548] sm:$0xff]
    %v297 = vld [vmem:[#allocation5 + $0x550] sm:$0xff]
    %v298 = vld [vmem:[#allocation5 + $0x558] sm:$0xff]
    %v299 = vld [vmem:[#allocation5 + $0x560] sm:$0xff]
    %v300 = vld [vmem:[#allocation5 + $0x568] sm:$0xff]
    %v301 = vld [vmem:[#allocation5 + $0x570] sm:$0xff]
    %v302 = vld [vmem:[#allocation5 + $0x578] sm:$0xff]
    %v303 = vld [vmem:[#allocation5 + $0x580] sm:$0xff]
    %v304 = vld [vmem:[#allocation5 + $0x588] sm:$0xff]
    %v305 = vld [vmem:[#allocation5 + $0x590] sm:$0xff]
    %v306 = vld [vmem:[#allocation5 + $0x598] sm:$0xff]
    %v307 = vld [vmem:[#allocation5 + $0x5a0] sm:$0xff]
    %v308 = vld [vmem:[#allocation5 + $0x5a8] sm:$0xff]
    %v309 = vld [vmem:[#allocation5 + $0x5b0] sm:$0xff]
    %v310 = vld [vmem:[#allocation5 + $0x5b8] sm:$0xff]
    %v311 = vld [vmem:[#allocation5 + $0x5c0] sm:$0xff]
    %v312 = vld [vmem:[#allocation5 + $0x5c8] sm:$0xff]
    %v313 = vld [vmem:[#allocation5 + $0x5d0] sm:$0xff]
    %v314 = vld [vmem:[#allocation5 + $0x5d8] sm:$0xff]
    %v315 = vld [vmem:[#allocation5 + $0x5e0] sm:$0xff]
    %v316 = vld [vmem:[#allocation5 + $0x5e8] sm:$0xff]
    %v317 = vld [vmem:[#allocation5 + $0x5f0] sm:$0xff]
    %v318 = vld [vmem:[#allocation5 + $0x5f8] sm:$0xff]
    %v319 = vld [vmem:[#allocation5 + $0x600] sm:$0xff]
    %v320 = vld [vmem:[#allocation5 + $0x608] sm:$0xff]
    %v321 = vld [vmem:[#allocation5 + $0x610] sm:$0xff]
    %v322 = vld [vmem:[#allocation5 + $0x618] sm:$0xff]
    %v323 = vld [vmem:[#allocation5 + $0x620] sm:$0xff]
    %v324 = vld [vmem:[#allocation5 + $0x628] sm:$0xff]
    %v325 = vld [vmem:[#allocation5 + $0x630] sm:$0xff]
    %v326 = vld [vmem:[#allocation5 + $0x638] sm:$0xff]
    %v327 = vld [vmem:[#allocation5 + $0x640] sm:$0xff]
    %v328 = vld [vmem:[#allocation5 + $0x648] sm:$0xff]
    %v329 = vld [vmem:[#allocation5 + $0x650] sm:$0xff]
    %v330 = vld [vmem:[#allocation5 + $0x658] sm:$0xff]
    %v331 = vld [vmem:[#allocation5 + $0x660] sm:$0xff]
    %v332 = vld [vmem:[#allocation5 + $0x668] sm:$0xff]
    %v333 = vld [vmem:[#allocation5 + $0x670] sm:$0xff]
    %v334 = vld [vmem:[#allocation5 + $0x678] sm:$0xff]
    %v335 = vld [vmem:[#allocation5 + $0x680] sm:$0xff]
    %v336 = vld [vmem:[#allocation5 + $0x688] sm:$0xff]
    %v337 = vld [vmem:[#allocation5 + $0x690] sm:$0xff]
    %v338 = vld [vmem:[#allocation5 + $0x698] sm:$0xff]
    %v339 = vld [vmem:[#allocation5 + $0x6a0] sm:$0xff]
    %v340 = vld [vmem:[#allocation5 + $0x6a8] sm:$0xff]
    %v341 = vld [vmem:[#allocation5 + $0x6b0] sm:$0xff]
    %v342 = vld [vmem:[#allocation5 + $0x6b8] sm:$0xff]
    %v343 = vld [vmem:[#allocation5 + $0x6c0] sm:$0xff]
    %v344 = vld [vmem:[#allocation5 + $0x6c8] sm:$0xff]
    %v345 = vld [vmem:[#allocation5 + $0x6d0] sm:$0xff]
    %v346 = vld [vmem:[#allocation5 + $0x6d8] sm:$0xff]
    %v347 = vld [vmem:[#allocation5 + $0x6e0] sm:$0xff]
    %v348 = vld [vmem:[#allocation5 + $0x6e8] sm:$0xff]
    %v349 = vld [vmem:[#allocation5 + $0x6f0] sm:$0xff]
    %v350 = vld [vmem:[#allocation5 + $0x6f8] sm:$0xff]
    %v351 = vld [vmem:[#allocation5 + $0x700] sm:$0xff]
    %v352 = vld [vmem:[#allocation5 + $0x708] sm:$0xff]
    %v353 = vld [vmem:[#allocation5 + $0x710] sm:$0xff]
    %v354 = vld [vmem:[#allocation5 + $0x718] sm:$0xff]
    %v355 = vld [vmem:[#allocation5 + $0x720] sm:$0xff]
    %v356 = vld [vmem:[#allocation5 + $0x728] sm:$0xff]
    %v357 = vld [vmem:[#allocation5 + $0x730] sm:$0xff]
    %v358 = vld [vmem:[#allocation5 + $0x738] sm:$0xff]
    %v359 = vld [vmem:[#allocation5 + $0x740] sm:$0xff]
    %v360 = vld [vmem:[#allocation5 + $0x748] sm:$0xff]
    %v361 = vld [vmem:[#allocation5 + $0x750] sm:$0xff]
    %v362 = vld [vmem:[#allocation5 + $0x758] sm:$0xff]
    %v363 = vld [vmem:[#allocation5 + $0x760] sm:$0xff]
    %v364 = vld [vmem:[#allocation5 + $0x768] sm:$0xff]
    %v365 = vld [vmem:[#allocation5 + $0x770] sm:$0xff]
    %v366 = vld [vmem:[#allocation5 + $0x778] sm:$0xff]
    %v367 = vld [vmem:[#allocation5 + $0x780] sm:$0xff]
    %v368 = vld [vmem:[#allocation5 + $0x788] sm:$0xff]
    %v369 = vld [vmem:[#allocation5 + $0x790] sm:$0xff]
    %v370 = vld [vmem:[#allocation5 + $0x798] sm:$0xff]
    %v371 = vld [vmem:[#allocation5 + $0x7a0] sm:$0xff]
    %v372 = vld [vmem:[#allocation5 + $0x7a8] sm:$0xff]
    %v373 = vld [vmem:[#allocation5 + $0x7b0] sm:$0xff]
    %v374 = vld [vmem:[#allocation5 + $0x7b8] sm:$0xff]
    %v375 = vld [vmem:[#allocation5 + $0x7c0] sm:$0xff]
    %v376 = vld [vmem:[#allocation5 + $0x7c8] sm:$0xff]
    %v377 = vld [vmem:[#allocation5 + $0x7d0] sm:$0xff]
    %v378 = vld [vmem:[#allocation5 + $0x7d8] sm:$0xff]
    %v379 = vld [vmem:[#allocation5 + $0x7e0] sm:$0xff]
    %v380 = vld [vmem:[#allocation5 + $0x7e8] sm:$0xff]
    %v381 = vld [vmem:[#allocation5 + $0x7f0] sm:$0xff]
    %v382 = vld [vmem:[#allocation5 + $0x7f8] sm:$0xff]
    %v383 = vld [vmem:[#allocation7] sm:$0xf]
    %v385 = vperm.slane %v383, 0
    %v386 = vperm.slane %v383, 1
    %v387 = vperm.slane %v383, 2
    %v388 = vperm.slane %v383, 3
    %v649 = vunpack.c.l.b16 %v127
    %v650 = vunpack.c.h.b16 %v127
    %v651 = vunpack.c.l.b16 %v128
    %v652 = vunpack.c.h.b16 %v128
    %v653 = vunpack.c.l.b16 %v129
    %v654 = vunpack.c.h.b16 %v129
    %v655 = vunpack.c.l.b16 %v130
    %v656 = vunpack.c.h.b16 %v130
    %v657 = vunpack.c.l.b16 %v131
    %v658 = vunpack.c.h.b16 %v131
    %v659 = vunpack.c.l.b16 %v132
    %v660 = vunpack.c.h.b16 %v132
    %v661 = vunpack.c.l.b16 %v133
    %v662 = vunpack.c.h.b16 %v133
    %v663 = vunpack.c.l.b16 %v134
    %v664 = vunpack.c.h.b16 %v134
    %v665 = vunpack.c.l.b16 %v135
    %v666 = vunpack.c.h.b16 %v135
    %v667 = vunpack.c.l.b16 %v136
    %v668 = vunpack.c.h.b16 %v136
    %v669 = vunpack.c.l.b16 %v137
    %v670 = vunpack.c.h.b16 %v137
    %v671 = vunpack.c.l.b16 %v138
    %v672 = vunpack.c.h.b16 %v138
    %v673 = vunpack.c.l.b16 %v139
    %v674 = vunpack.c.h.b16 %v139
    %v675 = vunpack.c.l.b16 %v140
    %v676 = vunpack.c.h.b16 %v140
    %v677 = vunpack.c.l.b16 %v141
    %v678 = vunpack.c.h.b16 %v141
    %v679 = vunpack.c.l.b16 %v142
    %v680 = vunpack.c.h.b16 %v142
    %v681 = vunpack.c.l.b16 %v143
    %v682 = vunpack.c.h.b16 %v143
    %v683 = vunpack.c.l.b16 %v144
    %v684 = vunpack.c.h.b16 %v144
    %v685 = vunpack.c.l.b16 %v145
    %v686 = vunpack.c.h.b16 %v145
    %v687 = vunpack.c.l.b16 %v146
    %v688 = vunpack.c.h.b16 %v146
    %v689 = vunpack.c.l.b16 %v147
    %v690 = vunpack.c.h.b16 %v147
    %v691 = vunpack.c.l.b16 %v148
    %v692 = vunpack.c.h.b16 %v148
    %v693 = vunpack.c.l.b16 %v149
    %v694 = vunpack.c.h.b16 %v149
    %v695 = vunpack.c.l.b16 %v150
    %v696 = vunpack.c.h.b16 %v150
    %v697 = vunpack.c.l.b16 %v151
    %v698 = vunpack.c.h.b16 %v151
    %v699 = vunpack.c.l.b16 %v152
    %v700 = vunpack.c.h.b16 %v152
    %v701 = vunpack.c.l.b16 %v153
    %v702 = vunpack.c.h.b16 %v153
    %v703 = vunpack.c.l.b16 %v154
    %v704 = vunpack.c.h.b16 %v154
    %v705 = vunpack.c.l.b16 %v155
    %v706 = vunpack.c.h.b16 %v155
    %v707 = vunpack.c.l.b16 %v156
    %v708 = vunpack.c.h.b16 %v156
    %v709 = vunpack.c.l.b16 %v157
    %v710 = vunpack.c.h.b16 %v157
    %v711 = vunpack.c.l.b16 %v158
    %v712 = vunpack.c.h.b16 %v158
    %v713 = vunpack.c.l.b16 %v159
    %v714 = vunpack.c.h.b16 %v159
    %v715 = vunpack.c.l.b16 %v160
    %v716 = vunpack.c.h.b16 %v160
    %v717 = vunpack.c.l.b16 %v161
    %v718 = vunpack.c.h.b16 %v161
    %v719 = vunpack.c.l.b16 %v162
    %v720 = vunpack.c.h.b16 %v162
    %v721 = vunpack.c.l.b16 %v163
    %v722 = vunpack.c.h.b16 %v163
    %v723 = vunpack.c.l.b16 %v164
    %v724 = vunpack.c.h.b16 %v164
    %v725 = vunpack.c.l.b16 %v165
    %v726 = vunpack.c.h.b16 %v165
    %v727 = vunpack.c.l.b16 %v166
    %v728 = vunpack.c.h.b16 %v166
    %v729 = vunpack.c.l.b16 %v167
    %v730 = vunpack.c.h.b16 %v167
    %v731 = vunpack.c.l.b16 %v168
    %v732 = vunpack.c.h.b16 %v168
    %v733 = vunpack.c.l.b16 %v169
    %v734 = vunpack.c.h.b16 %v169
    %v735 = vunpack.c.l.b16 %v170
    %v736 = vunpack.c.h.b16 %v170
    %v737 = vunpack.c.l.b16 %v171
    %v738 = vunpack.c.h.b16 %v171
    %v739 = vunpack.c.l.b16 %v172
    %v740 = vunpack.c.h.b16 %v172
    %v741 = vunpack.c.l.b16 %v173
    %v742 = vunpack.c.h.b16 %v173
    %v743 = vunpack.c.l.b16 %v174
    %v744 = vunpack.c.h.b16 %v174
    %v745 = vunpack.c.l.b16 %v175
    %v746 = vunpack.c.h.b16 %v175
    %v747 = vunpack.c.l.b16 %v176
    %v748 = vunpack.c.h.b16 %v176
    %v749 = vunpack.c.l.b16 %v177
    %v750 = vunpack.c.h.b16 %v177
    %v751 = vunpack.c.l.b16 %v178
    %v752 = vunpack.c.h.b16 %v178
    %v753 = vunpack.c.l.b16 %v179
    %v754 = vunpack.c.h.b16 %v179
    %v755 = vunpack.c.l.b16 %v180
    %v756 = vunpack.c.h.b16 %v180
    %v757 = vunpack.c.l.b16 %v181
    %v758 = vunpack.c.h.b16 %v181
    %v759 = vunpack.c.l.b16 %v182
    %v760 = vunpack.c.h.b16 %v182
    %v761 = vunpack.c.l.b16 %v183
    %v762 = vunpack.c.h.b16 %v183
    %v763 = vunpack.c.l.b16 %v184
    %v764 = vunpack.c.h.b16 %v184
    %v765 = vunpack.c.l.b16 %v185
    %v766 = vunpack.c.h.b16 %v185
    %v767 = vunpack.c.l.b16 %v186
    %v768 = vunpack.c.h.b16 %v186
    %v769 = vunpack.c.l.b16 %v187
    %v770 = vunpack.c.h.b16 %v187
    %v771 = vunpack.c.l.b16 %v188
    %v772 = vunpack.c.h.b16 %v188
    %v773 = vunpack.c.l.b16 %v189
    %v774 = vunpack.c.h.b16 %v189
    %v775 = vunpack.c.l.b16 %v190
    %v776 = vunpack.c.h.b16 %v190
    %v777 = vunpack.c.l.b16 %v191
    %v778 = vunpack.c.h.b16 %v191
    %v779 = vunpack.c.l.b16 %v192
    %v780 = vunpack.c.h.b16 %v192
    %v781 = vunpack.c.l.b16 %v193
    %v782 = vunpack.c.h.b16 %v193
    %v783 = vunpack.c.l.b16 %v194
    %v784 = vunpack.c.h.b16 %v194
    %v785 = vunpack.c.l.b16 %v195
    %v786 = vunpack.c.h.b16 %v195
    %v787 = vunpack.c.l.b16 %v196
    %v788 = vunpack.c.h.b16 %v196
    %v789 = vunpack.c.l.b16 %v197
    %v790 = vunpack.c.h.b16 %v197
    %v791 = vunpack.c.l.b16 %v198
    %v792 = vunpack.c.h.b16 %v198
    %v793 = vunpack.c.l.b16 %v199
    %v794 = vunpack.c.h.b16 %v199
    %v795 = vunpack.c.l.b16 %v200
    %v796 = vunpack.c.h.b16 %v200
    %v797 = vunpack.c.l.b16 %v201
    %v798 = vunpack.c.h.b16 %v201
    %v799 = vunpack.c.l.b16 %v202
    %v800 = vunpack.c.h.b16 %v202
    %v801 = vunpack.c.l.b16 %v203
    %v802 = vunpack.c.h.b16 %v203
    %v803 = vunpack.c.l.b16 %v204
    %v804 = vunpack.c.h.b16 %v204
    %v805 = vunpack.c.l.b16 %v205
    %v806 = vunpack.c.h.b16 %v205
    %v807 = vunpack.c.l.b16 %v206
    %v808 = vunpack.c.h.b16 %v206
    %v809 = vunpack.c.l.b16 %v207
    %v810 = vunpack.c.h.b16 %v207
    %v811 = vunpack.c.l.b16 %v208
    %v812 = vunpack.c.h.b16 %v208
    %v813 = vunpack.c.l.b16 %v209
    %v814 = vunpack.c.h.b16 %v209
    %v815 = vunpack.c.l.b16 %v210
    %v816 = vunpack.c.h.b16 %v210
    %v817 = vunpack.c.l.b16 %v211
    %v818 = vunpack.c.h.b16 %v211
    %v819 = vunpack.c.l.b16 %v212
    %v820 = vunpack.c.h.b16 %v212
    %v821 = vunpack.c.l.b16 %v213
    %v822 = vunpack.c.h.b16 %v213
    %v823 = vunpack.c.l.b16 %v214
    %v824 = vunpack.c.h.b16 %v214
    %v825 = vunpack.c.l.b16 %v215
    %v826 = vunpack.c.h.b16 %v215
    %v827 = vunpack.c.l.b16 %v216
    %v828 = vunpack.c.h.b16 %v216
    %v829 = vunpack.c.l.b16 %v217
    %v830 = vunpack.c.h.b16 %v217
    %v831 = vunpack.c.l.b16 %v218
    %v832 = vunpack.c.h.b16 %v218
    %v833 = vunpack.c.l.b16 %v219
    %v834 = vunpack.c.h.b16 %v219
    %v835 = vunpack.c.l.b16 %v220
    %v836 = vunpack.c.h.b16 %v220
    %v837 = vunpack.c.l.b16 %v221
    %v838 = vunpack.c.h.b16 %v221
    %v839 = vunpack.c.l.b16 %v222
    %v840 = vunpack.c.h.b16 %v222
    %v841 = vunpack.c.l.b16 %v223
    %v842 = vunpack.c.h.b16 %v223
    %v843 = vunpack.c.l.b16 %v224
    %v844 = vunpack.c.h.b16 %v224
    %v845 = vunpack.c.l.b16 %v225
    %v846 = vunpack.c.h.b16 %v225
    %v847 = vunpack.c.l.b16 %v226
    %v848 = vunpack.c.h.b16 %v226
    %v849 = vunpack.c.l.b16 %v227
    %v850 = vunpack.c.h.b16 %v227
    %v851 = vunpack.c.l.b16 %v228
    %v852 = vunpack.c.h.b16 %v228
    %v853 = vunpack.c.l.b16 %v229
    %v854 = vunpack.c.h.b16 %v229
    %v855 = vunpack.c.l.b16 %v230
    %v856 = vunpack.c.h.b16 %v230
    %v857 = vunpack.c.l.b16 %v231
    %v858 = vunpack.c.h.b16 %v231
    %v859 = vunpack.c.l.b16 %v232
    %v860 = vunpack.c.h.b16 %v232
    %v861 = vunpack.c.l.b16 %v233
    %v862 = vunpack.c.h.b16 %v233
    %v863 = vunpack.c.l.b16 %v234
    %v864 = vunpack.c.h.b16 %v234
    %v865 = vunpack.c.l.b16 %v235
    %v866 = vunpack.c.h.b16 %v235
    %v867 = vunpack.c.l.b16 %v236
    %v868 = vunpack.c.h.b16 %v236
    %v869 = vunpack.c.l.b16 %v237
    %v870 = vunpack.c.h.b16 %v237
    %v871 = vunpack.c.l.b16 %v238
    %v872 = vunpack.c.h.b16 %v238
    %v873 = vunpack.c.l.b16 %v239
    %v874 = vunpack.c.h.b16 %v239
    %v875 = vunpack.c.l.b16 %v240
    %v876 = vunpack.c.h.b16 %v240
    %v877 = vunpack.c.l.b16 %v241
    %v878 = vunpack.c.h.b16 %v241
    %v879 = vunpack.c.l.b16 %v242
    %v880 = vunpack.c.h.b16 %v242
    %v881 = vunpack.c.l.b16 %v243
    %v882 = vunpack.c.h.b16 %v243
    %v883 = vunpack.c.l.b16 %v244
    %v884 = vunpack.c.h.b16 %v244
    %v885 = vunpack.c.l.b16 %v245
    %v886 = vunpack.c.h.b16 %v245
    %v887 = vunpack.c.l.b16 %v246
    %v888 = vunpack.c.h.b16 %v246
    %v889 = vunpack.c.l.b16 %v247
    %v890 = vunpack.c.h.b16 %v247
    %v891 = vunpack.c.l.b16 %v248
    %v892 = vunpack.c.h.b16 %v248
    %v893 = vunpack.c.l.b16 %v249
    %v894 = vunpack.c.h.b16 %v249
    %v895 = vunpack.c.l.b16 %v250
    %v896 = vunpack.c.h.b16 %v250
    %v897 = vunpack.c.l.b16 %v251
    %v898 = vunpack.c.h.b16 %v251
    %v899 = vunpack.c.l.b16 %v252
    %v900 = vunpack.c.h.b16 %v252
    %v901 = vunpack.c.l.b16 %v253
    %v902 = vunpack.c.h.b16 %v253
    %v903 = vunpack.c.l.b16 %v254
    %v904 = vunpack.c.h.b16 %v254
    %v905 = vunpack.c.l.b16 %v255
    %v906 = vunpack.c.h.b16 %v255
    %v907 = vunpack.c.l.b16 %v256
    %v908 = vunpack.c.h.b16 %v256
    %v909 = vunpack.c.l.b16 %v257
    %v910 = vunpack.c.h.b16 %v257
    %v911 = vunpack.c.l.b16 %v258
    %v912 = vunpack.c.h.b16 %v258
    %v913 = vunpack.c.l.b16 %v259
    %v914 = vunpack.c.h.b16 %v259
    %v915 = vunpack.c.l.b16 %v260
    %v916 = vunpack.c.h.b16 %v260
    %v917 = vunpack.c.l.b16 %v261
    %v918 = vunpack.c.h.b16 %v261
    %v919 = vunpack.c.l.b16 %v262
    %v920 = vunpack.c.h.b16 %v262
    %v921 = vunpack.c.l.b16 %v263
    %v922 = vunpack.c.h.b16 %v263
    %v923 = vunpack.c.l.b16 %v264
    %v924 = vunpack.c.h.b16 %v264
    %v925 = vunpack.c.l.b16 %v265
    %v926 = vunpack.c.h.b16 %v265
    %v927 = vunpack.c.l.b16 %v266
    %v928 = vunpack.c.h.b16 %v266
    %v929 = vunpack.c.l.b16 %v267
    %v930 = vunpack.c.h.b16 %v267
    %v931 = vunpack.c.l.b16 %v268
    %v932 = vunpack.c.h.b16 %v268
    %v933 = vunpack.c.l.b16 %v269
    %v934 = vunpack.c.h.b16 %v269
    %v935 = vunpack.c.l.b16 %v270
    %v936 = vunpack.c.h.b16 %v270
    %v937 = vunpack.c.l.b16 %v271
    %v938 = vunpack.c.h.b16 %v271
    %v939 = vunpack.c.l.b16 %v272
    %v940 = vunpack.c.h.b16 %v272
    %v941 = vunpack.c.l.b16 %v273
    %v942 = vunpack.c.h.b16 %v273
    %v943 = vunpack.c.l.b16 %v274
    %v944 = vunpack.c.h.b16 %v274
    %v945 = vunpack.c.l.b16 %v275
    %v946 = vunpack.c.h.b16 %v275
    %v947 = vunpack.c.l.b16 %v276
    %v948 = vunpack.c.h.b16 %v276
    %v949 = vunpack.c.l.b16 %v277
    %v950 = vunpack.c.h.b16 %v277
    %v951 = vunpack.c.l.b16 %v278
    %v952 = vunpack.c.h.b16 %v278
    %v953 = vunpack.c.l.b16 %v279
    %v954 = vunpack.c.h.b16 %v279
    %v955 = vunpack.c.l.b16 %v280
    %v956 = vunpack.c.h.b16 %v280
    %v957 = vunpack.c.l.b16 %v281
    %v958 = vunpack.c.h.b16 %v281
    %v959 = vunpack.c.l.b16 %v282
    %v960 = vunpack.c.h.b16 %v282
    %v961 = vunpack.c.l.b16 %v283
    %v962 = vunpack.c.h.b16 %v283
    %v963 = vunpack.c.l.b16 %v284
    %v964 = vunpack.c.h.b16 %v284
    %v965 = vunpack.c.l.b16 %v285
    %v966 = vunpack.c.h.b16 %v285
    %v967 = vunpack.c.l.b16 %v286
    %v968 = vunpack.c.h.b16 %v286
    %v969 = vunpack.c.l.b16 %v287
    %v970 = vunpack.c.h.b16 %v287
    %v971 = vunpack.c.l.b16 %v288
    %v972 = vunpack.c.h.b16 %v288
    %v973 = vunpack.c.l.b16 %v289
    %v974 = vunpack.c.h.b16 %v289
    %v975 = vunpack.c.l.b16 %v290
    %v976 = vunpack.c.h.b16 %v290
    %v977 = vunpack.c.l.b16 %v291
    %v978 = vunpack.c.h.b16 %v291
    %v979 = vunpack.c.l.b16 %v292
    %v980 = vunpack.c.h.b16 %v292
    %v981 = vunpack.c.l.b16 %v293
    %v982 = vunpack.c.h.b16 %v293
    %v983 = vunpack.c.l.b16 %v294
    %v984 = vunpack.c.h.b16 %v294
    %v985 = vunpack.c.l.b16 %v295
    %v986 = vunpack.c.h.b16 %v295
    %v987 = vunpack.c.l.b16 %v296
    %v988 = vunpack.c.h.b16 %v296
    %v989 = vunpack.c.l.b16 %v297
    %v990 = vunpack.c.h.b16 %v297
    %v991 = vunpack.c.l.b16 %v298
    %v992 = vunpack.c.h.b16 %v298
    %v993 = vunpack.c.l.b16 %v299
    %v994 = vunpack.c.h.b16 %v299
    %v995 = vunpack.c.l.b16 %v300
    %v996 = vunpack.c.h.b16 %v300
    %v997 = vunpack.c.l.b16 %v301
    %v998 = vunpack.c.h.b16 %v301
    %v999 = vunpack.c.l.b16 %v302
    %v1000 = vunpack.c.h.b16 %v302
    %v1001 = vunpack.c.l.b16 %v303
    %v1002 = vunpack.c.h.b16 %v303
    %v1003 = vunpack.c.l.b16 %v304
    %v1004 = vunpack.c.h.b16 %v304
    %v1005 = vunpack.c.l.b16 %v305
    %v1006 = vunpack.c.h.b16 %v305
    %v1007 = vunpack.c.l.b16 %v306
    %v1008 = vunpack.c.h.b16 %v306
    %v1009 = vunpack.c.l.b16 %v307
    %v1010 = vunpack.c.h.b16 %v307
    %v1011 = vunpack.c.l.b16 %v308
    %v1012 = vunpack.c.h.b16 %v308
    %v1013 = vunpack.c.l.b16 %v309
    %v1014 = vunpack.c.h.b16 %v309
    %v1015 = vunpack.c.l.b16 %v310
    %v1016 = vunpack.c.h.b16 %v310
    %v1017 = vunpack.c.l.b16 %v311
    %v1018 = vunpack.c.h.b16 %v311
    %v1019 = vunpack.c.l.b16 %v312
    %v1020 = vunpack.c.h.b16 %v312
    %v1021 = vunpack.c.l.b16 %v313
    %v1022 = vunpack.c.h.b16 %v313
    %v1023 = vunpack.c.l.b16 %v314
    %v1024 = vunpack.c.h.b16 %v314
    %v1025 = vunpack.c.l.b16 %v315
    %v1026 = vunpack.c.h.b16 %v315
    %v1027 = vunpack.c.l.b16 %v316
    %v1028 = vunpack.c.h.b16 %v316
    %v1029 = vunpack.c.l.b16 %v317
    %v1030 = vunpack.c.h.b16 %v317
    %v1031 = vunpack.c.l.b16 %v318
    %v1032 = vunpack.c.h.b16 %v318
    %v1033 = vunpack.c.l.b16 %v319
    %v1034 = vunpack.c.h.b16 %v319
    %v1035 = vunpack.c.l.b16 %v320
    %v1036 = vunpack.c.h.b16 %v320
    %v1037 = vunpack.c.l.b16 %v321
    %v1038 = vunpack.c.h.b16 %v321
    %v1039 = vunpack.c.l.b16 %v322
    %v1040 = vunpack.c.h.b16 %v322
    %v1041 = vunpack.c.l.b16 %v323
    %v1042 = vunpack.c.h.b16 %v323
    %v1043 = vunpack.c.l.b16 %v324
    %v1044 = vunpack.c.h.b16 %v324
    %v1045 = vunpack.c.l.b16 %v325
    %v1046 = vunpack.c.h.b16 %v325
    %v1047 = vunpack.c.l.b16 %v326
    %v1048 = vunpack.c.h.b16 %v326
    %v1049 = vunpack.c.l.b16 %v327
    %v1050 = vunpack.c.h.b16 %v327
    %v1051 = vunpack.c.l.b16 %v328
    %v1052 = vunpack.c.h.b16 %v328
    %v1053 = vunpack.c.l.b16 %v329
    %v1054 = vunpack.c.h.b16 %v329
    %v1055 = vunpack.c.l.b16 %v330
    %v1056 = vunpack.c.h.b16 %v330
    %v1057 = vunpack.c.l.b16 %v331
    %v1058 = vunpack.c.h.b16 %v331
    %v1059 = vunpack.c.l.b16 %v332
    %v1060 = vunpack.c.h.b16 %v332
    %v1061 = vunpack.c.l.b16 %v333
    %v1062 = vunpack.c.h.b16 %v333
    %v1063 = vunpack.c.l.b16 %v334
    %v1064 = vunpack.c.h.b16 %v334
    %v1065 = vunpack.c.l.b16 %v335
    %v1066 = vunpack.c.h.b16 %v335
    %v1067 = vunpack.c.l.b16 %v336
    %v1068 = vunpack.c.h.b16 %v336
    %v1069 = vunpack.c.l.b16 %v337
    %v1070 = vunpack.c.h.b16 %v337
    %v1071 = vunpack.c.l.b16 %v338
    %v1072 = vunpack.c.h.b16 %v338
    %v1073 = vunpack.c.l.b16 %v339
    %v1074 = vunpack.c.h.b16 %v339
    %v1075 = vunpack.c.l.b16 %v340
    %v1076 = vunpack.c.h.b16 %v340
    %v1077 = vunpack.c.l.b16 %v341
    %v1078 = vunpack.c.h.b16 %v341
    %v1079 = vunpack.c.l.b16 %v342
    %v1080 = vunpack.c.h.b16 %v342
    %v1081 = vunpack.c.l.b16 %v343
    %v1082 = vunpack.c.h.b16 %v343
    %v1083 = vunpack.c.l.b16 %v344
    %v1084 = vunpack.c.h.b16 %v344
    %v1085 = vunpack.c.l.b16 %v345
    %v1086 = vunpack.c.h.b16 %v345
    %v1087 = vunpack.c.l.b16 %v346
    %v1088 = vunpack.c.h.b16 %v346
    %v1089 = vunpack.c.l.b16 %v347
    %v1090 = vunpack.c.h.b16 %v347
    %v1091 = vunpack.c.l.b16 %v348
    %v1092 = vunpack.c.h.b16 %v348
    %v1093 = vunpack.c.l.b16 %v349
    %v1094 = vunpack.c.h.b16 %v349
    %v1095 = vunpack.c.l.b16 %v350
    %v1096 = vunpack.c.h.b16 %v350
    %v1097 = vunpack.c.l.b16 %v351
    %v1098 = vunpack.c.h.b16 %v351
    %v1099 = vunpack.c.l.b16 %v352
    %v1100 = vunpack.c.h.b16 %v352
    %v1101 = vunpack.c.l.b16 %v353
    %v1102 = vunpack.c.h.b16 %v353
    %v1103 = vunpack.c.l.b16 %v354
    %v1104 = vunpack.c.h.b16 %v354
    %v1105 = vunpack.c.l.b16 %v355
    %v1106 = vunpack.c.h.b16 %v355
    %v1107 = vunpack.c.l.b16 %v356
    %v1108 = vunpack.c.h.b16 %v356
    %v1109 = vunpack.c.l.b16 %v357
    %v1110 = vunpack.c.h.b16 %v357
    %v1111 = vunpack.c.l.b16 %v358
    %v1112 = vunpack.c.h.b16 %v358
    %v1113 = vunpack.c.l.b16 %v359
    %v1114 = vunpack.c.h.b16 %v359
    %v1115 = vunpack.c.l.b16 %v360
    %v1116 = vunpack.c.h.b16 %v360
    %v1117 = vunpack.c.l.b16 %v361
    %v1118 = vunpack.c.h.b16 %v361
    %v1119 = vunpack.c.l.b16 %v362
    %v1120 = vunpack.c.h.b16 %v362
    %v1121 = vunpack.c.l.b16 %v363
    %v1122 = vunpack.c.h.b16 %v363
    %v1123 = vunpack.c.l.b16 %v364
    %v1124 = vunpack.c.h.b16 %v364
    %v1125 = vunpack.c.l.b16 %v365
    %v1126 = vunpack.c.h.b16 %v365
    %v1127 = vunpack.c.l.b16 %v366
    %v1128 = vunpack.c.h.b16 %v366
    %v1129 = vunpack.c.l.b16 %v367
    %v1130 = vunpack.c.h.b16 %v367
    %v1131 = vunpack.c.l.b16 %v368
    %v1132 = vunpack.c.h.b16 %v368
    %v1133 = vunpack.c.l.b16 %v369
    %v1134 = vunpack.c.h.b16 %v369
    %v1135 = vunpack.c.l.b16 %v370
    %v1136 = vunpack.c.h.b16 %v370
    %v1137 = vunpack.c.l.b16 %v371
    %v1138 = vunpack.c.h.b16 %v371
    %v1139 = vunpack.c.l.b16 %v372
    %v1140 = vunpack.c.h.b16 %v372
    %v1141 = vunpack.c.l.b16 %v373
    %v1142 = vunpack.c.h.b16 %v373
    %v1143 = vunpack.c.l.b16 %v374
    %v1144 = vunpack.c.h.b16 %v374
    %v1145 = vunpack.c.l.b16 %v375
    %v1146 = vunpack.c.h.b16 %v375
    %v1147 = vunpack.c.l.b16 %v376
    %v1148 = vunpack.c.h.b16 %v376
    %v1149 = vunpack.c.l.b16 %v377
    %v1150 = vunpack.c.h.b16 %v377
    %v1151 = vunpack.c.l.b16 %v378
    %v1152 = vunpack.c.h.b16 %v378
    %v1153 = vunpack.c.l.b16 %v379
    %v1154 = vunpack.c.h.b16 %v379
    %v1155 = vunpack.c.l.b16 %v380
    %v1156 = vunpack.c.h.b16 %v380
    %v1157 = vunpack.c.l.b16 %v381
    %v1158 = vunpack.c.h.b16 %v381
    %v1159 = vunpack.c.l.b16 %v382
    %v1160 = vunpack.c.h.b16 %v382
    %v1161 = vpack.c.b16 %v653, %v649
    %v1162 = vpack.c.b16 %v654, %v650
    %v1163 = vpack.c.b16 %v655, %v651
    %v1164 = vpack.c.b16 %v656, %v652
    %v1165 = vpack.c.b16 %v661, %v657
    %v1166 = vpack.c.b16 %v662, %v658
    %v1167 = vpack.c.b16 %v663, %v659
    %v1168 = vpack.c.b16 %v664, %v660
    %v1169 = vpack.c.b16 %v669, %v665
    %v1170 = vpack.c.b16 %v670, %v666
    %v1171 = vpack.c.b16 %v671, %v667
    %v1172 = vpack.c.b16 %v672, %v668
    %v1173 = vpack.c.b16 %v677, %v673
    %v1174 = vpack.c.b16 %v678, %v674
    %v1175 = vpack.c.b16 %v679, %v675
    %v1176 = vpack.c.b16 %v680, %v676
    %v1177 = vpack.c.b16 %v685, %v681
    %v1178 = vpack.c.b16 %v686, %v682
    %v1179 = vpack.c.b16 %v687, %v683
    %v1180 = vpack.c.b16 %v688, %v684
    %v1181 = vpack.c.b16 %v693, %v689
    %v1182 = vpack.c.b16 %v694, %v690
    %v1183 = vpack.c.b16 %v695, %v691
    %v1184 = vpack.c.b16 %v696, %v692
    %v1185 = vpack.c.b16 %v701, %v697
    %v1186 = vpack.c.b16 %v702, %v698
    %v1187 = vpack.c.b16 %v703, %v699
    %v1188 = vpack.c.b16 %v704, %v700
    %v1189 = vpack.c.b16 %v709, %v705
    %v1190 = vpack.c.b16 %v710, %v706
    %v1191 = vpack.c.b16 %v711, %v707
    %v1192 = vpack.c.b16 %v712, %v708
    %v1193 = vpack.c.b16 %v717, %v713
    %v1194 = vpack.c.b16 %v718, %v714
    %v1195 = vpack.c.b16 %v719, %v715
    %v1196 = vpack.c.b16 %v720, %v716
    %v1197 = vpack.c.b16 %v725, %v721
    %v1198 = vpack.c.b16 %v726, %v722
    %v1199 = vpack.c.b16 %v727, %v723
    %v1200 = vpack.c.b16 %v728, %v724
    %v1201 = vpack.c.b16 %v733, %v729
    %v1202 = vpack.c.b16 %v734, %v730
    %v1203 = vpack.c.b16 %v735, %v731
    %v1204 = vpack.c.b16 %v736, %v732
    %v1205 = vpack.c.b16 %v741, %v737
    %v1206 = vpack.c.b16 %v742, %v738
    %v1207 = vpack.c.b16 %v743, %v739
    %v1208 = vpack.c.b16 %v744, %v740
    %v1209 = vpack.c.b16 %v749, %v745
    %v1210 = vpack.c.b16 %v750, %v746
    %v1211 = vpack.c.b16 %v751, %v747
    %v1212 = vpack.c.b16 %v752, %v748
    %v1213 = vpack.c.b16 %v757, %v753
    %v1214 = vpack.c.b16 %v758, %v754
    %v1215 = vpack.c.b16 %v759, %v755
    %v1216 = vpack.c.b16 %v760, %v756
    %v1217 = vpack.c.b16 %v765, %v761
    %v1218 = vpack.c.b16 %v766, %v762
    %v1219 = vpack.c.b16 %v767, %v763
    %v1220 = vpack.c.b16 %v768, %v764
    %v1221 = vpack.c.b16 %v773, %v769
    %v1222 = vpack.c.b16 %v774, %v770
    %v1223 = vpack.c.b16 %v775, %v771
    %v1224 = vpack.c.b16 %v776, %v772
    %v1225 = vpack.c.b16 %v781, %v777
    %v1226 = vpack.c.b16 %v782, %v778
    %v1227 = vpack.c.b16 %v783, %v779
    %v1228 = vpack.c.b16 %v784, %v780
    %v1229 = vpack.c.b16 %v789, %v785
    %v1230 = vpack.c.b16 %v790, %v786
    %v1231 = vpack.c.b16 %v791, %v787
    %v1232 = vpack.c.b16 %v792, %v788
    %v1233 = vpack.c.b16 %v797, %v793
    %v1234 = vpack.c.b16 %v798, %v794
    %v1235 = vpack.c.b16 %v799, %v795
    %v1236 = vpack.c.b16 %v800, %v796
    %v1237 = vpack.c.b16 %v805, %v801
    %v1238 = vpack.c.b16 %v806, %v802
    %v1239 = vpack.c.b16 %v807, %v803
    %v1240 = vpack.c.b16 %v808, %v804
    %v1241 = vpack.c.b16 %v813, %v809
    %v1242 = vpack.c.b16 %v814, %v810
    %v1243 = vpack.c.b16 %v815, %v811
    %v1244 = vpack.c.b16 %v816, %v812
    %v1245 = vpack.c.b16 %v821, %v817
    %v1246 = vpack.c.b16 %v822, %v818
    %v1247 = vpack.c.b16 %v823, %v819
    %v1248 = vpack.c.b16 %v824, %v820
    %v1249 = vpack.c.b16 %v829, %v825
    %v1250 = vpack.c.b16 %v830, %v826
    %v1251 = vpack.c.b16 %v831, %v827
    %v1252 = vpack.c.b16 %v832, %v828
    %v1253 = vpack.c.b16 %v837, %v833
    %v1254 = vpack.c.b16 %v838, %v834
    %v1255 = vpack.c.b16 %v839, %v835
    %v1256 = vpack.c.b16 %v840, %v836
    %v1257 = vpack.c.b16 %v845, %v841
    %v1258 = vpack.c.b16 %v846, %v842
    %v1259 = vpack.c.b16 %v847, %v843
    %v1260 = vpack.c.b16 %v848, %v844
    %v1261 = vpack.c.b16 %v853, %v849
    %v1262 = vpack.c.b16 %v854, %v850
    %v1263 = vpack.c.b16 %v855, %v851
    %v1264 = vpack.c.b16 %v856, %v852
    %v1265 = vpack.c.b16 %v861, %v857
    %v1266 = vpack.c.b16 %v862, %v858
    %v1267 = vpack.c.b16 %v863, %v859
    %v1268 = vpack.c.b16 %v864, %v860
    %v1269 = vpack.c.b16 %v869, %v865
    %v1270 = vpack.c.b16 %v870, %v866
    %v1271 = vpack.c.b16 %v871, %v867
    %v1272 = vpack.c.b16 %v872, %v868
    %v1273 = vpack.c.b16 %v877, %v873
    %v1274 = vpack.c.b16 %v878, %v874
    %v1275 = vpack.c.b16 %v879, %v875
    %v1276 = vpack.c.b16 %v880, %v876
    %v1277 = vpack.c.b16 %v885, %v881
    %v1278 = vpack.c.b16 %v886, %v882
    %v1279 = vpack.c.b16 %v887, %v883
    %v1280 = vpack.c.b16 %v888, %v884
    %v1281 = vpack.c.b16 %v893, %v889
    %v1282 = vpack.c.b16 %v894, %v890
    %v1283 = vpack.c.b16 %v895, %v891
    %v1284 = vpack.c.b16 %v896, %v892
    %v1285 = vpack.c.b16 %v901, %v897
    %v1286 = vpack.c.b16 %v902, %v898
    %v1287 = vpack.c.b16 %v903, %v899
    %v1288 = vpack.c.b16 %v904, %v900
    %v1289 = vpack.c.b16 %v909, %v905
    %v1290 = vpack.c.b16 %v910, %v906
    %v1291 = vpack.c.b16 %v911, %v907
    %v1292 = vpack.c.b16 %v912, %v908
    %v1293 = vpack.c.b16 %v917, %v913
    %v1294 = vpack.c.b16 %v918, %v914
    %v1295 = vpack.c.b16 %v919, %v915
    %v1296 = vpack.c.b16 %v920, %v916
    %v1297 = vpack.c.b16 %v925, %v921
    %v1298 = vpack.c.b16 %v926, %v922
    %v1299 = vpack.c.b16 %v927, %v923
    %v1300 = vpack.c.b16 %v928, %v924
    %v1301 = vpack.c.b16 %v933, %v929
    %v1302 = vpack.c.b16 %v934, %v930
    %v1303 = vpack.c.b16 %v935, %v931
    %v1304 = vpack.c.b16 %v936, %v932
    %v1305 = vpack.c.b16 %v941, %v937
    %v1306 = vpack.c.b16 %v942, %v938
    %v1307 = vpack.c.b16 %v943, %v939
    %v1308 = vpack.c.b16 %v944, %v940
    %v1309 = vpack.c.b16 %v949, %v945
    %v1310 = vpack.c.b16 %v950, %v946
    %v1311 = vpack.c.b16 %v951, %v947
    %v1312 = vpack.c.b16 %v952, %v948
    %v1313 = vpack.c.b16 %v957, %v953
    %v1314 = vpack.c.b16 %v958, %v954
    %v1315 = vpack.c.b16 %v959, %v955
    %v1316 = vpack.c.b16 %v960, %v956
    %v1317 = vpack.c.b16 %v965, %v961
    %v1318 = vpack.c.b16 %v966, %v962
    %v1319 = vpack.c.b16 %v967, %v963
    %v1320 = vpack.c.b16 %v968, %v964
    %v1321 = vpack.c.b16 %v973, %v969
    %v1322 = vpack.c.b16 %v974, %v970
    %v1323 = vpack.c.b16 %v975, %v971
    %v1324 = vpack.c.b16 %v976, %v972
    %v1325 = vpack.c.b16 %v981, %v977
    %v1326 = vpack.c.b16 %v982, %v978
    %v1327 = vpack.c.b16 %v983, %v979
    %v1328 = vpack.c.b16 %v984, %v980
    %v1329 = vpack.c.b16 %v989, %v985
    %v1330 = vpack.c.b16 %v990, %v986
    %v1331 = vpack.c.b16 %v991, %v987
    %v1332 = vpack.c.b16 %v992, %v988
    %v1333 = vpack.c.b16 %v997, %v993
    %v1334 = vpack.c.b16 %v998, %v994
    %v1335 = vpack.c.b16 %v999, %v995
    %v1336 = vpack.c.b16 %v1000, %v996
    %v1337 = vpack.c.b16 %v1005, %v1001
    %v1338 = vpack.c.b16 %v1006, %v1002
    %v1339 = vpack.c.b16 %v1007, %v1003
    %v1340 = vpack.c.b16 %v1008, %v1004
    %v1341 = vpack.c.b16 %v1013, %v1009
    %v1342 = vpack.c.b16 %v1014, %v1010
    %v1343 = vpack.c.b16 %v1015, %v1011
    %v1344 = vpack.c.b16 %v1016, %v1012
    %v1345 = vpack.c.b16 %v1021, %v1017
    %v1346 = vpack.c.b16 %v1022, %v1018
    %v1347 = vpack.c.b16 %v1023, %v1019
    %v1348 = vpack.c.b16 %v1024, %v1020
    %v1349 = vpack.c.b16 %v1029, %v1025
    %v1350 = vpack.c.b16 %v1030, %v1026
    %v1351 = vpack.c.b16 %v1031, %v1027
    %v1352 = vpack.c.b16 %v1032, %v1028
    %v1353 = vpack.c.b16 %v1037, %v1033
    %v1354 = vpack.c.b16 %v1038, %v1034
    %v1355 = vpack.c.b16 %v1039, %v1035
    %v1356 = vpack.c.b16 %v1040, %v1036
    %v1357 = vpack.c.b16 %v1045, %v1041
    %v1358 = vpack.c.b16 %v1046, %v1042
    %v1359 = vpack.c.b16 %v1047, %v1043
    %v1360 = vpack.c.b16 %v1048, %v1044
    %v1361 = vpack.c.b16 %v1053, %v1049
    %v1362 = vpack.c.b16 %v1054, %v1050
    %v1363 = vpack.c.b16 %v1055, %v1051
    %v1364 = vpack.c.b16 %v1056, %v1052
    %v1365 = vpack.c.b16 %v1061, %v1057
    %v1366 = vpack.c.b16 %v1062, %v1058
    %v1367 = vpack.c.b16 %v1063, %v1059
    %v1368 = vpack.c.b16 %v1064, %v1060
    %v1369 = vpack.c.b16 %v1069, %v1065
    %v1370 = vpack.c.b16 %v1070, %v1066
    %v1371 = vpack.c.b16 %v1071, %v1067
    %v1372 = vpack.c.b16 %v1072, %v1068
    %v1373 = vpack.c.b16 %v1077, %v1073
    %v1374 = vpack.c.b16 %v1078, %v1074
    %v1375 = vpack.c.b16 %v1079, %v1075
    %v1376 = vpack.c.b16 %v1080, %v1076
    %v1377 = vpack.c.b16 %v1085, %v1081
    %v1378 = vpack.c.b16 %v1086, %v1082
    %v1379 = vpack.c.b16 %v1087, %v1083
    %v1380 = vpack.c.b16 %v1088, %v1084
    %v1381 = vpack.c.b16 %v1093, %v1089
    %v1382 = vpack.c.b16 %v1094, %v1090
    %v1383 = vpack.c.b16 %v1095, %v1091
    %v1384 = vpack.c.b16 %v1096, %v1092
    %v1385 = vpack.c.b16 %v1101, %v1097
    %v1386 = vpack.c.b16 %v1102, %v1098
    %v1387 = vpack.c.b16 %v1103, %v1099
    %v1388 = vpack.c.b16 %v1104, %v1100
    %v1389 = vpack.c.b16 %v1109, %v1105
    %v1390 = vpack.c.b16 %v1110, %v1106
    %v1391 = vpack.c.b16 %v1111, %v1107
    %v1392 = vpack.c.b16 %v1112, %v1108
    %v1393 = vpack.c.b16 %v1117, %v1113
    %v1394 = vpack.c.b16 %v1118, %v1114
    %v1395 = vpack.c.b16 %v1119, %v1115
    %v1396 = vpack.c.b16 %v1120, %v1116
    %v1397 = vpack.c.b16 %v1125, %v1121
    %v1398 = vpack.c.b16 %v1126, %v1122
    %v1399 = vpack.c.b16 %v1127, %v1123
    %v1400 = vpack.c.b16 %v1128, %v1124
    %v1401 = vpack.c.b16 %v1133, %v1129
    %v1402 = vpack.c.b16 %v1134, %v1130
    %v1403 = vpack.c.b16 %v1135, %v1131
    %v1404 = vpack.c.b16 %v1136, %v1132
    %v1405 = vpack.c.b16 %v1141, %v1137
    %v1406 = vpack.c.b16 %v1142, %v1138
    %v1407 = vpack.c.b16 %v1143, %v1139
    %v1408 = vpack.c.b16 %v1144, %v1140
    %v1409 = vpack.c.b16 %v1149, %v1145
    %v1410 = vpack.c.b16 %v1150, %v1146
    %v1411 = vpack.c.b16 %v1151, %v1147
    %v1412 = vpack.c.b16 %v1152, %v1148
    %v1413 = vpack.c.b16 %v1157, %v1153
    %v1414 = vpack.c.b16 %v1158, %v1154
    %v1415 = vpack.c.b16 %v1159, %v1155
    %v1416 = vpack.c.b16 %v1160, %v1156
    %1673 = vmatpush.bf16.msra.mxu0 %v1189
    %1674 = vmatpush.bf16.msra.mxu0 %v1185
    %1675 = vmatpush.bf16.msra.mxu0 %v1181
    %1676 = vmatpush.bf16.msra.mxu0 %v1177
    %1677 = vmatpush.bf16.msra.mxu0 %v1173
    %1678 = vmatpush.bf16.msra.mxu0 %v1169
    %1679 = vmatpush.bf16.msra.mxu0 %v1165
    %1680 = vmatpush.bf16.msra.mxu0 %v1161
    %1681 = vmatmul.bf16.gmra.mxu0 %v119
    %v1682 = vpop.f32.mrf.mxu0
    %v1683 = vadd.f32 %v385, %v1682
    %v1684 = vpop.f32.mrf.mxu0
    %v1685 = vadd.f32 %v385, %v1684
    %1686 = vdwg.mxu0
    %1687 = vmatpush.bf16.msra.mxu0 %v1221
    %1688 = vmatpush.bf16.msra.mxu0 %v1217
    %1689 = vmatpush.bf16.msra.mxu0 %v1213
    %1690 = vmatpush.bf16.msra.mxu0 %v1209
    %1691 = vmatpush.bf16.msra.mxu0 %v1205
    %1692 = vmatpush.bf16.msra.mxu0 %v1201
    %1693 = vmatpush.bf16.msra.mxu0 %v1197
    %1694 = vmatpush.bf16.msra.mxu0 %v1193
    %1695 = vmatmul.bf16.gmra.mxu0 %v120
    %v1696 = vpop.f32.mrf.mxu0
    %v1697 = vadd.f32 %v1683, %v1696
    %v1698 = vpop.f32.mrf.mxu0
    %v1699 = vadd.f32 %v1685, %v1698
    %1700 = vdwg.mxu0
    %1701 = vmatpush.bf16.msra.mxu0 %v1253
    %1702 = vmatpush.bf16.msra.mxu0 %v1249
    %1703 = vmatpush.bf16.msra.mxu0 %v1245
    %1704 = vmatpush.bf16.msra.mxu0 %v1241
    %1705 = vmatpush.bf16.msra.mxu0 %v1237
    %1706 = vmatpush.bf16.msra.mxu0 %v1233
    %1707 = vmatpush.bf16.msra.mxu0 %v1229
    %1708 = vmatpush.bf16.msra.mxu0 %v1225
    %1709 = vmatmul.bf16.gmra.mxu0 %v121
    %v1710 = vpop.f32.mrf.mxu0
    %v1711 = vadd.f32 %v1697, %v1710
    %v1712 = vpop.f32.mrf.mxu0
    %v1713 = vadd.f32 %v1699, %v1712
    %1714 = vdwg.mxu0
    %1715 = vmatpush.bf16.msra.mxu0 %v1285
    %1716 = vmatpush.bf16.msra.mxu0 %v1281
    %1717 = vmatpush.bf16.msra.mxu0 %v1277
    %1718 = vmatpush.bf16.msra.mxu0 %v1273
    %1719 = vmatpush.bf16.msra.mxu0 %v1269
    %1720 = vmatpush.bf16.msra.mxu0 %v1265
    %1721 = vmatpush.bf16.msra.mxu0 %v1261
    %1722 = vmatpush.bf16.msra.mxu0 %v1257
    %1723 = vmatmul.bf16.gmra.mxu0 %v122
    %v1724 = vpop.f32.mrf.mxu0
    %v1725 = vadd.f32 %v1711, %v1724
    %v1726 = vpop.f32.mrf.mxu0
    %v1727 = vadd.f32 %v1713, %v1726
    %1728 = vdwg.mxu0
    %1729 = vmatpush.bf16.msra.mxu0 %v1317
    %1730 = vmatpush.bf16.msra.mxu0 %v1313
    %1731 = vmatpush.bf16.msra.mxu0 %v1309
    %1732 = vmatpush.bf16.msra.mxu0 %v1305
    %1733 = vmatpush.bf16.msra.mxu0 %v1301
    %1734 = vmatpush.bf16.msra.mxu0 %v1297
    %1735 = vmatpush.bf16.msra.mxu0 %v1293
    %1736 = vmatpush.bf16.msra.mxu0 %v1289
    %1737 = vmatmul.bf16.gmra.mxu0 %v123
    %v1738 = vpop.f32.mrf.mxu0
    %v1739 = vadd.f32 %v1725, %v1738
    %v1740 = vpop.f32.mrf.mxu0
    %v1741 = vadd.f32 %v1727, %v1740
    %1742 = vdwg.mxu0
    %1743 = vmatpush.bf16.msra.mxu0 %v1349
    %1744 = vmatpush.bf16.msra.mxu0 %v1345
    %1745 = vmatpush.bf16.msra.mxu0 %v1341
    %1746 = vmatpush.bf16.msra.mxu0 %v1337
    %1747 = vmatpush.bf16.msra.mxu0 %v1333
    %1748 = vmatpush.bf16.msra.mxu0 %v1329
    %1749 = vmatpush.bf16.msra.mxu0 %v1325
    %1750 = vmatpush.bf16.msra.mxu0 %v1321
    %1751 = vmatmul.bf16.gmra.mxu0 %v124
    %v1752 = vpop.f32.mrf.mxu0
    %v1753 = vadd.f32 %v1739, %v1752
    %v1754 = vpop.f32.mrf.mxu0
    %v1755 = vadd.f32 %v1741, %v1754
    %1756 = vdwg.mxu0
    %1757 = vmatpush.bf16.msra.mxu0 %v1381
    %1758 = vmatpush.bf16.msra.mxu0 %v1377
    %1759 = vmatpush.bf16.msra.mxu0 %v1373
    %1760 = vmatpush.bf16.msra.mxu0 %v1369
    %1761 = vmatpush.bf16.msra.mxu0 %v1365
    %1762 = vmatpush.bf16.msra.mxu0 %v1361
    %1763 = vmatpush.bf16.msra.mxu0 %v1357
    %1764 = vmatpush.bf16.msra.mxu0 %v1353
    %1765 = vmatmul.bf16.gmra.mxu0 %v125
    %v1766 = vpop.f32.mrf.mxu0
    %v1767 = vadd.f32 %v1753, %v1766
    %v1768 = vpop.f32.mrf.mxu0
    %v1769 = vadd.f32 %v1755, %v1768
    %1770 = vdwg.mxu0
    %1771 = vmatpush.bf16.msra.mxu0 %v1413
    %1772 = vmatpush.bf16.msra.mxu0 %v1409
    %1773 = vmatpush.bf16.msra.mxu0 %v1405
    %1774 = vmatpush.bf16.msra.mxu0 %v1401
    %1775 = vmatpush.bf16.msra.mxu0 %v1397
    %1776 = vmatpush.bf16.msra.mxu0 %v1393
    %1777 = vmatpush.bf16.msra.mxu0 %v1389
    %1778 = vmatpush.bf16.msra.mxu0 %v1385
    %1779 = vmatmul.bf16.gmra.mxu0 %v126
    %v1780 = vpop.f32.mrf.mxu0
    %v1781 = vadd.f32 %v1767, %v1780
    %v1782 = vpop.f32.mrf.mxu0
    %v1783 = vadd.f32 %v1769, %v1782
    %1784 = vdwg.mxu0
    %1785 = vmatpush.bf16.msra.mxu0 %v1190
    %1786 = vmatpush.bf16.msra.mxu0 %v1186
    %1787 = vmatpush.bf16.msra.mxu0 %v1182
    %1788 = vmatpush.bf16.msra.mxu0 %v1178
    %1789 = vmatpush.bf16.msra.mxu0 %v1174
    %1790 = vmatpush.bf16.msra.mxu0 %v1170
    %1791 = vmatpush.bf16.msra.mxu0 %v1166
    %1792 = vmatpush.bf16.msra.mxu0 %v1162
    %1793 = vmatmul.bf16.gmra.mxu0 %v119
    %v1794 = vpop.f32.mrf.mxu0
    %v1795 = vadd.f32 %v386, %v1794
    %v1796 = vpop.f32.mrf.mxu0
    %v1797 = vadd.f32 %v386, %v1796
    %1798 = vdwg.mxu0
    %1799 = vmatpush.bf16.msra.mxu0 %v1222
    %1800 = vmatpush.bf16.msra.mxu0 %v1218
    %1801 = vmatpush.bf16.msra.mxu0 %v1214
    %1802 = vmatpush.bf16.msra.mxu0 %v1210
    %1803 = vmatpush.bf16.msra.mxu0 %v1206
    %1804 = vmatpush.bf16.msra.mxu0 %v1202
    %1805 = vmatpush.bf16.msra.mxu0 %v1198
    %1806 = vmatpush.bf16.msra.mxu0 %v1194
    %1807 = vmatmul.bf16.gmra.mxu0 %v120
    %v1808 = vpop.f32.mrf.mxu0
    %v1809 = vadd.f32 %v1795, %v1808
    %v1810 = vpop.f32.mrf.mxu0
    %v1811 = vadd.f32 %v1797, %v1810
    %1812 = vdwg.mxu0
    %1813 = vmatpush.bf16.msra.mxu0 %v1254
    %1814 = vmatpush.bf16.msra.mxu0 %v1250
    %1815 = vmatpush.bf16.msra.mxu0 %v1246
    %1816 = vmatpush.bf16.msra.mxu0 %v1242
    %1817 = vmatpush.bf16.msra.mxu0 %v1238
    %1818 = vmatpush.bf16.msra.mxu0 %v1234
    %1819 = vmatpush.bf16.msra.mxu0 %v1230
    %1820 = vmatpush.bf16.msra.mxu0 %v1226
    %1821 = vmatmul.bf16.gmra.mxu0 %v121
    %v1822 = vpop.f32.mrf.mxu0
    %v1823 = vadd.f32 %v1809, %v1822
    %v1824 = vpop.f32.mrf.mxu0
    %v1825 = vadd.f32 %v1811, %v1824
    %1826 = vdwg.mxu0
    %1827 = vmatpush.bf16.msra.mxu0 %v1286
    %1828 = vmatpush.bf16.msra.mxu0 %v1282
    %1829 = vmatpush.bf16.msra.mxu0 %v1278
    %1830 = vmatpush.bf16.msra.mxu0 %v1274
    %1831 = vmatpush.bf16.msra.mxu0 %v1270
    %1832 = vmatpush.bf16.msra.mxu0 %v1266
    %1833 = vmatpush.bf16.msra.mxu0 %v1262
    %1834 = vmatpush.bf16.msra.mxu0 %v1258
    %1835 = vmatmul.bf16.gmra.mxu0 %v122
    %v1836 = vpop.f32.mrf.mxu0
    %v1837 = vadd.f32 %v1823, %v1836
    %v1838 = vpop.f32.mrf.mxu0
    %v1839 = vadd.f32 %v1825, %v1838
    %1840 = vdwg.mxu0
    %1841 = vmatpush.bf16.msra.mxu0 %v1318
    %1842 = vmatpush.bf16.msra.mxu0 %v1314
    %1843 = vmatpush.bf16.msra.mxu0 %v1310
    %1844 = vmatpush.bf16.msra.mxu0 %v1306
    %1845 = vmatpush.bf16.msra.mxu0 %v1302
    %1846 = vmatpush.bf16.msra.mxu0 %v1298
    %1847 = vmatpush.bf16.msra.mxu0 %v1294
    %1848 = vmatpush.bf16.msra.mxu0 %v1290
    %1849 = vmatmul.bf16.gmra.mxu0 %v123
    %v1850 = vpop.f32.mrf.mxu0
    %v1851 = vadd.f32 %v1837, %v1850
    %v1852 = vpop.f32.mrf.mxu0
    %v1853 = vadd.f32 %v1839, %v1852
    %1854 = vdwg.mxu0
    %1855 = vmatpush.bf16.msra.mxu0 %v1350
    %1856 = vmatpush.bf16.msra.mxu0 %v1346
    %1857 = vmatpush.bf16.msra.mxu0 %v1342
    %1858 = vmatpush.bf16.msra.mxu0 %v1338
    %1859 = vmatpush.bf16.msra.mxu0 %v1334
    %1860 = vmatpush.bf16.msra.mxu0 %v1330
    %1861 = vmatpush.bf16.msra.mxu0 %v1326
    %1862 = vmatpush.bf16.msra.mxu0 %v1322
    %1863 = vmatmul.bf16.gmra.mxu0 %v124
    %v1864 = vpop.f32.mrf.mxu0
    %v1865 = vadd.f32 %v1851, %v1864
    %v1866 = vpop.f32.mrf.mxu0
    %v1867 = vadd.f32 %v1853, %v1866
    %1868 = vdwg.mxu0
    %1869 = vmatpush.bf16.msra.mxu0 %v1382
    %1870 = vmatpush.bf16.msra.mxu0 %v1378
    %1871 = vmatpush.bf16.msra.mxu0 %v1374
    %1872 = vmatpush.bf16.msra.mxu0 %v1370
    %1873 = vmatpush.bf16.msra.mxu0 %v1366
    %1874 = vmatpush.bf16.msra.mxu0 %v1362
    %1875 = vmatpush.bf16.msra.mxu0 %v1358
    %1876 = vmatpush.bf16.msra.mxu0 %v1354
    %1877 = vmatmul.bf16.gmra.mxu0 %v125
    %v1878 = vpop.f32.mrf.mxu0
    %v1879 = vadd.f32 %v1865, %v1878
    %v1880 = vpop.f32.mrf.mxu0
    %v1881 = vadd.f32 %v1867, %v1880
    %1882 = vdwg.mxu0
    %1883 = vmatpush.bf16.msra.mxu0 %v1414
    %1884 = vmatpush.bf16.msra.mxu0 %v1410
    %1885 = vmatpush.bf16.msra.mxu0 %v1406
    %1886 = vmatpush.bf16.msra.mxu0 %v1402
    %1887 = vmatpush.bf16.msra.mxu0 %v1398
    %1888 = vmatpush.bf16.msra.mxu0 %v1394
    %1889 = vmatpush.bf16.msra.mxu0 %v1390
    %1890 = vmatpush.bf16.msra.mxu0 %v1386
    %1891 = vmatmul.bf16.gmra.mxu0 %v126
    %v1892 = vpop.f32.mrf.mxu0
    %v1893 = vadd.f32 %v1879, %v1892
    %v1894 = vpop.f32.mrf.mxu0
    %v1895 = vadd.f32 %v1881, %v1894
    %1896 = vdwg.mxu0
    %1897 = vmatpush.bf16.msra.mxu0 %v1191
    %1898 = vmatpush.bf16.msra.mxu0 %v1187
    %1899 = vmatpush.bf16.msra.mxu0 %v1183
    %1900 = vmatpush.bf16.msra.mxu0 %v1179
    %1901 = vmatpush.bf16.msra.mxu0 %v1175
    %1902 = vmatpush.bf16.msra.mxu0 %v1171
    %1903 = vmatpush.bf16.msra.mxu0 %v1167
    %1904 = vmatpush.bf16.msra.mxu0 %v1163
    %1905 = vmatmul.bf16.gmra.mxu0 %v119
    %v1906 = vpop.f32.mrf.mxu0
    %v1907 = vadd.f32 %v387, %v1906
    %v1908 = vpop.f32.mrf.mxu0
    %v1909 = vadd.f32 %v387, %v1908
    %1910 = vdwg.mxu0
    %1911 = vmatpush.bf16.msra.mxu0 %v1223
    %1912 = vmatpush.bf16.msra.mxu0 %v1219
    %1913 = vmatpush.bf16.msra.mxu0 %v1215
    %1914 = vmatpush.bf16.msra.mxu0 %v1211
    %1915 = vmatpush.bf16.msra.mxu0 %v1207
    %1916 = vmatpush.bf16.msra.mxu0 %v1203
    %1917 = vmatpush.bf16.msra.mxu0 %v1199
    %1918 = vmatpush.bf16.msra.mxu0 %v1195
    %1919 = vmatmul.bf16.gmra.mxu0 %v120
    %v1920 = vpop.f32.mrf.mxu0
    %v1921 = vadd.f32 %v1907, %v1920
    %v1922 = vpop.f32.mrf.mxu0
    %v1923 = vadd.f32 %v1909, %v1922
    %1924 = vdwg.mxu0
    %1925 = vmatpush.bf16.msra.mxu0 %v1255
    %1926 = vmatpush.bf16.msra.mxu0 %v1251
    %1927 = vmatpush.bf16.msra.mxu0 %v1247
    %1928 = vmatpush.bf16.msra.mxu0 %v1243
    %1929 = vmatpush.bf16.msra.mxu0 %v1239
    %1930 = vmatpush.bf16.msra.mxu0 %v1235
    %1931 = vmatpush.bf16.msra.mxu0 %v1231
    %1932 = vmatpush.bf16.msra.mxu0 %v1227
    %1933 = vmatmul.bf16.gmra.mxu0 %v121
    %v1934 = vpop.f32.mrf.mxu0
    %v1935 = vadd.f32 %v1921, %v1934
    %v1936 = vpop.f32.mrf.mxu0
    %v1937 = vadd.f32 %v1923, %v1936
    %1938 = vdwg.mxu0
    %1939 = vmatpush.bf16.msra.mxu0 %v1287
    %1940 = vmatpush.bf16.msra.mxu0 %v1283
    %1941 = vmatpush.bf16.msra.mxu0 %v1279
    %1942 = vmatpush.bf16.msra.mxu0 %v1275
    %1943 = vmatpush.bf16.msra.mxu0 %v1271
    %1944 = vmatpush.bf16.msra.mxu0 %v1267
    %1945 = vmatpush.bf16.msra.mxu0 %v1263
    %1946 = vmatpush.bf16.msra.mxu0 %v1259
    %1947 = vmatmul.bf16.gmra.mxu0 %v122
    %v1948 = vpop.f32.mrf.mxu0
    %v1949 = vadd.f32 %v1935, %v1948
    %v1950 = vpop.f32.mrf.mxu0
    %v1951 = vadd.f32 %v1937, %v1950
    %1952 = vdwg.mxu0
    %1953 = vmatpush.bf16.msra.mxu0 %v1319
    %1954 = vmatpush.bf16.msra.mxu0 %v1315
    %1955 = vmatpush.bf16.msra.mxu0 %v1311
    %1956 = vmatpush.bf16.msra.mxu0 %v1307
    %1957 = vmatpush.bf16.msra.mxu0 %v1303
    %1958 = vmatpush.bf16.msra.mxu0 %v1299
    %1959 = vmatpush.bf16.msra.mxu0 %v1295
    %1960 = vmatpush.bf16.msra.mxu0 %v1291
    %1961 = vmatmul.bf16.gmra.mxu0 %v123
    %v1962 = vpop.f32.mrf.mxu0
    %v1963 = vadd.f32 %v1949, %v1962
    %v1964 = vpop.f32.mrf.mxu0
    %v1965 = vadd.f32 %v1951, %v1964
    %1966 = vdwg.mxu0
    %1967 = vmatpush.bf16.msra.mxu0 %v1351
    %1968 = vmatpush.bf16.msra.mxu0 %v1347
    %1969 = vmatpush.bf16.msra.mxu0 %v1343
    %1970 = vmatpush.bf16.msra.mxu0 %v1339
    %1971 = vmatpush.bf16.msra.mxu0 %v1335
    %1972 = vmatpush.bf16.msra.mxu0 %v1331
    %1973 = vmatpush.bf16.msra.mxu0 %v1327
    %1974 = vmatpush.bf16.msra.mxu0 %v1323
    %1975 = vmatmul.bf16.gmra.mxu0 %v124
    %v1976 = vpop.f32.mrf.mxu0
    %v1977 = vadd.f32 %v1963, %v1976
    %v1978 = vpop.f32.mrf.mxu0
    %v1979 = vadd.f32 %v1965, %v1978
    %1980 = vdwg.mxu0
    %1981 = vmatpush.bf16.msra.mxu0 %v1383
    %1982 = vmatpush.bf16.msra.mxu0 %v1379
    %1983 = vmatpush.bf16.msra.mxu0 %v1375
    %1984 = vmatpush.bf16.msra.mxu0 %v1371
    %1985 = vmatpush.bf16.msra.mxu0 %v1367
    %1986 = vmatpush.bf16.msra.mxu0 %v1363
    %1987 = vmatpush.bf16.msra.mxu0 %v1359
    %1988 = vmatpush.bf16.msra.mxu0 %v1355
    %1989 = vmatmul.bf16.gmra.mxu0 %v125
    %v1990 = vpop.f32.mrf.mxu0
    %v1991 = vadd.f32 %v1977, %v1990
    %v1992 = vpop.f32.mrf.mxu0
    %v1993 = vadd.f32 %v1979, %v1992
    %1994 = vdwg.mxu0
    %1995 = vmatpush.bf16.msra.mxu0 %v1415
    %1996 = vmatpush.bf16.msra.mxu0 %v1411
    %1997 = vmatpush.bf16.msra.mxu0 %v1407
    %1998 = vmatpush.bf16.msra.mxu0 %v1403
    %1999 = vmatpush.bf16.msra.mxu0 %v1399
    %2000 = vmatpush.bf16.msra.mxu0 %v1395
    %2001 = vmatpush.bf16.msra.mxu0 %v1391
    %2002 = vmatpush.bf16.msra.mxu0 %v1387
    %2003 = vmatmul.bf16.gmra.mxu0 %v126
    %v2004 = vpop.f32.mrf.mxu0
    %v2005 = vadd.f32 %v1991, %v2004
    %v2006 = vpop.f32.mrf.mxu0
    %v2007 = vadd.f32 %v1993, %v2006
    %2008 = vdwg.mxu0
    %2009 = vmatpush.bf16.msra.mxu0 %v1192
    %2010 = vmatpush.bf16.msra.mxu0 %v1188
    %2011 = vmatpush.bf16.msra.mxu0 %v1184
    %2012 = vmatpush.bf16.msra.mxu0 %v1180
    %2013 = vmatpush.bf16.msra.mxu0 %v1176
    %2014 = vmatpush.bf16.msra.mxu0 %v1172
    %2015 = vmatpush.bf16.msra.mxu0 %v1168
    %2016 = vmatpush.bf16.msra.mxu0 %v1164
    %2017 = vmatmul.bf16.gmra.mxu0 %v119
    %v2018 = vpop.f32.mrf.mxu0
    %v2019 = vadd.f32 %v388, %v2018
    %v2020 = vpop.f32.mrf.mxu0
    %v2021 = vadd.f32 %v388, %v2020
    %2022 = vdwg.mxu0
    %2023 = vmatpush.bf16.msra.mxu0 %v1224
    %2024 = vmatpush.bf16.msra.mxu0 %v1220
    %2025 = vmatpush.bf16.msra.mxu0 %v1216
    %2026 = vmatpush.bf16.msra.mxu0 %v1212
    %2027 = vmatpush.bf16.msra.mxu0 %v1208
    %2028 = vmatpush.bf16.msra.mxu0 %v1204
    %2029 = vmatpush.bf16.msra.mxu0 %v1200
    %2030 = vmatpush.bf16.msra.mxu0 %v1196
    %2031 = vmatmul.bf16.gmra.mxu0 %v120
    %v2032 = vpop.f32.mrf.mxu0
    %v2033 = vadd.f32 %v2019, %v2032
    %v2034 = vpop.f32.mrf.mxu0
    %v2035 = vadd.f32 %v2021, %v2034
    %2036 = vdwg.mxu0
    %2037 = vmatpush.bf16.msra.mxu0 %v1256
    %2038 = vmatpush.bf16.msra.mxu0 %v1252
    %2039 = vmatpush.bf16.msra.mxu0 %v1248
    %2040 = vmatpush.bf16.msra.mxu0 %v1244
    %2041 = vmatpush.bf16.msra.mxu0 %v1240
    %2042 = vmatpush.bf16.msra.mxu0 %v1236
    %2043 = vmatpush.bf16.msra.mxu0 %v1232
    %2044 = vmatpush.bf16.msra.mxu0 %v1228
    %2045 = vmatmul.bf16.gmra.mxu0 %v121
    %v2046 = vpop.f32.mrf.mxu0
    %v2047 = vadd.f32 %v2033, %v2046
    %v2048 = vpop.f32.mrf.mxu0
    %v2049 = vadd.f32 %v2035, %v2048
    %2050 = vdwg.mxu0
    %2051 = vmatpush.bf16.msra.mxu0 %v1288
    %2052 = vmatpush.bf16.msra.mxu0 %v1284
    %2053 = vmatpush.bf16.msra.mxu0 %v1280
    %2054 = vmatpush.bf16.msra.mxu0 %v1276
    %2055 = vmatpush.bf16.msra.mxu0 %v1272
    %2056 = vmatpush.bf16.msra.mxu0 %v1268
    %2057 = vmatpush.bf16.msra.mxu0 %v1264
    %2058 = vmatpush.bf16.msra.mxu0 %v1260
    %2059 = vmatmul.bf16.gmra.mxu0 %v122
    %v2060 = vpop.f32.mrf.mxu0
    %v2061 = vadd.f32 %v2047, %v2060
    %v2062 = vpop.f32.mrf.mxu0
    %v2063 = vadd.f32 %v2049, %v2062
    %2064 = vdwg.mxu0
    %2065 = vmatpush.bf16.msra.mxu0 %v1320
    %2066 = vmatpush.bf16.msra.mxu0 %v1316
    %2067 = vmatpush.bf16.msra.mxu0 %v1312
    %2068 = vmatpush.bf16.msra.mxu0 %v1308
    %2069 = vmatpush.bf16.msra.mxu0 %v1304
    %2070 = vmatpush.bf16.msra.mxu0 %v1300
    %2071 = vmatpush.bf16.msra.mxu0 %v1296
    %2072 = vmatpush.bf16.msra.mxu0 %v1292
    %2073 = vmatmul.bf16.gmra.mxu0 %v123
    %v2074 = vpop.f32.mrf.mxu0
    %v2075 = vadd.f32 %v2061, %v2074
    %v2076 = vpop.f32.mrf.mxu0
    %v2077 = vadd.f32 %v2063, %v2076
    %2078 = vdwg.mxu0
    %2079 = vmatpush.bf16.msra.mxu0 %v1352
    %2080 = vmatpush.bf16.msra.mxu0 %v1348
    %2081 = vmatpush.bf16.msra.mxu0 %v1344
    %2082 = vmatpush.bf16.msra.mxu0 %v1340
    %2083 = vmatpush.bf16.msra.mxu0 %v1336
    %2084 = vmatpush.bf16.msra.mxu0 %v1332
    %2085 = vmatpush.bf16.msra.mxu0 %v1328
    %2086 = vmatpush.bf16.msra.mxu0 %v1324
    %2087 = vmatmul.bf16.gmra.mxu0 %v124
    %v2088 = vpop.f32.mrf.mxu0
    %v2089 = vadd.f32 %v2075, %v2088
    %v2090 = vpop.f32.mrf.mxu0
    %v2091 = vadd.f32 %v2077, %v2090
    %2092 = vdwg.mxu0
    %2093 = vmatpush.bf16.msra.mxu0 %v1384
    %2094 = vmatpush.bf16.msra.mxu0 %v1380
    %2095 = vmatpush.bf16.msra.mxu0 %v1376
    %2096 = vmatpush.bf16.msra.mxu0 %v1372
    %2097 = vmatpush.bf16.msra.mxu0 %v1368
    %2098 = vmatpush.bf16.msra.mxu0 %v1364
    %2099 = vmatpush.bf16.msra.mxu0 %v1360
    %2100 = vmatpush.bf16.msra.mxu0 %v1356
    %2101 = vmatmul.bf16.gmra.mxu0 %v125
    %v2102 = vpop.f32.mrf.mxu0
    %v2103 = vadd.f32 %v2089, %v2102
    %v2104 = vpop.f32.mrf.mxu0
    %v2105 = vadd.f32 %v2091, %v2104
    %2106 = vdwg.mxu0
    %2107 = vmatpush.bf16.msra.mxu0 %v1416
    %2108 = vmatpush.bf16.msra.mxu0 %v1412
    %2109 = vmatpush.bf16.msra.mxu0 %v1408
    %2110 = vmatpush.bf16.msra.mxu0 %v1404
    %2111 = vmatpush.bf16.msra.mxu0 %v1400
    %2112 = vmatpush.bf16.msra.mxu0 %v1396
    %2113 = vmatpush.bf16.msra.mxu0 %v1392
    %2114 = vmatpush.bf16.msra.mxu0 %v1388
    %2115 = vmatmul.bf16.gmra.mxu0 %v126
    %v2116 = vpop.f32.mrf.mxu0
    %v2117 = vadd.f32 %v2103, %v2116
    %v2118 = vpop.f32.mrf.mxu0
    %v2119 = vadd.f32 %v2105, %v2118
    %2120 = vdwg.mxu0
    %v2121 = vmax.f32 %v1781, 0.0
    %v2122 = vmax.f32 %v1893, 0.0
    %v2123 = vmax.f32 %v2005, 0.0
    %v2124 = vmax.f32 %v2117, 0.0
    %v2125 = vmax.f32 %v1783, 0.0
    %v2126 = vmax.f32 %v1895, 0.0
    %v2127 = vmax.f32 %v2007, 0.0
    %v2128 = vmax.f32 %v2119, 0.0
    %v2129 = vpack.c.bf16 %v2125, %v2121
    %v2130 = vpack.c.bf16 %v2126, %v2122
    %v2131 = vpack.c.bf16 %v2127, %v2123
    %v2132 = vpack.c.bf16 %v2128, %v2124
    %v2133 = vld [vmem:[#allocation8] sm:$0xf]
    %v2134 = vld [vmem:[#allocation8 + $0x4] sm:$0xf]
    %v2135 = vld [vmem:[#allocation8 + $0x8] sm:$0xf]
    %v2136 = vld [vmem:[#allocation8 + $0xc] sm:$0xf]
    %v2137 = vld [vmem:[#allocation8 + $0x10] sm:$0xf]
    %v2138 = vld [vmem:[#allocation8 + $0x14] sm:$0xf]
    %v2139 = vld [vmem:[#allocation8 + $0x18] sm:$0xf]
    %v2140 = vld [vmem:[#allocation8 + $0x1c] sm:$0xf]
    %v2141 = vld [vmem:[#allocation8 + $0x20] sm:$0xf]
    %v2142 = vld [vmem:[#allocation8 + $0x24] sm:$0xf]
    %v2143 = vld [vmem:[#allocation8 + $0x28] sm:$0xf]
    %v2144 = vld [vmem:[#allocation8 + $0x2c] sm:$0xf]
    %v2145 = vld [vmem:[#allocation8 + $0x30] sm:$0xf]
    %v2146 = vld [vmem:[#allocation8 + $0x34] sm:$0xf]
    %v2147 = vld [vmem:[#allocation8 + $0x38] sm:$0xf]
    %v2148 = vld [vmem:[#allocation8 + $0x3c] sm:$0xf]
    %v2149 = vld [vmem:[#allocation8 + $0x40] sm:$0xf]
    %v2150 = vld [vmem:[#allocation8 + $0x44] sm:$0xf]
    %v2151 = vld [vmem:[#allocation8 + $0x48] sm:$0xf]
    %v2152 = vld [vmem:[#allocation8 + $0x4c] sm:$0xf]
    %v2153 = vld [vmem:[#allocation8 + $0x50] sm:$0xf]
    %v2154 = vld [vmem:[#allocation8 + $0x54] sm:$0xf]
    %v2155 = vld [vmem:[#allocation8 + $0x58] sm:$0xf]
    %v2156 = vld [vmem:[#allocation8 + $0x5c] sm:$0xf]
    %v2157 = vld [vmem:[#allocation8 + $0x60] sm:$0xf]
    %v2158 = vld [vmem:[#allocation8 + $0x64] sm:$0xf]
    %v2159 = vld [vmem:[#allocation8 + $0x68] sm:$0xf]
    %v2160 = vld [vmem:[#allocation8 + $0x6c] sm:$0xf]
    %v2161 = vld [vmem:[#allocation8 + $0x70] sm:$0xf]
    %v2162 = vld [vmem:[#allocation8 + $0x74] sm:$0xf]
    %v2163 = vld [vmem:[#allocation8 + $0x78] sm:$0xf]
    %v2164 = vld [vmem:[#allocation8 + $0x7c] sm:$0xf]
    %v2165 = vld [vmem:[#allocation8 + $0x80] sm:$0xf]
    %v2166 = vld [vmem:[#allocation8 + $0x84] sm:$0xf]
    %v2167 = vld [vmem:[#allocation8 + $0x88] sm:$0xf]
    %v2168 = vld [vmem:[#allocation8 + $0x8c] sm:$0xf]
    %v2169 = vld [vmem:[#allocation8 + $0x90] sm:$0xf]
    %v2170 = vld [vmem:[#allocation8 + $0x94] sm:$0xf]
    %v2171 = vld [vmem:[#allocation8 + $0x98] sm:$0xf]
    %v2172 = vld [vmem:[#allocation8 + $0x9c] sm:$0xf]
    %v2173 = vld [vmem:[#allocation8 + $0xa0] sm:$0xf]
    %v2174 = vld [vmem:[#allocation8 + $0xa4] sm:$0xf]
    %v2175 = vld [vmem:[#allocation8 + $0xa8] sm:$0xf]
    %v2176 = vld [vmem:[#allocation8 + $0xac] sm:$0xf]
    %v2177 = vld [vmem:[#allocation8 + $0xb0] sm:$0xf]
    %v2178 = vld [vmem:[#allocation8 + $0xb4] sm:$0xf]
    %v2179 = vld [vmem:[#allocation8 + $0xb8] sm:$0xf]
    %v2180 = vld [vmem:[#allocation8 + $0xbc] sm:$0xf]
    %v2181 = vld [vmem:[#allocation8 + $0xc0] sm:$0xf]
    %v2182 = vld [vmem:[#allocation8 + $0xc4] sm:$0xf]
    %v2183 = vld [vmem:[#allocation8 + $0xc8] sm:$0xf]
    %v2184 = vld [vmem:[#allocation8 + $0xcc] sm:$0xf]
    %v2185 = vld [vmem:[#allocation8 + $0xd0] sm:$0xf]
    %v2186 = vld [vmem:[#allocation8 + $0xd4] sm:$0xf]
    %v2187 = vld [vmem:[#allocation8 + $0xd8] sm:$0xf]
    %v2188 = vld [vmem:[#allocation8 + $0xdc] sm:$0xf]
    %v2189 = vld [vmem:[#allocation8 + $0xe0] sm:$0xf]
    %v2190 = vld [vmem:[#allocation8 + $0xe4] sm:$0xf]
    %v2191 = vld [vmem:[#allocation8 + $0xe8] sm:$0xf]
    %v2192 = vld [vmem:[#allocation8 + $0xec] sm:$0xf]
    %v2193 = vld [vmem:[#allocation8 + $0xf0] sm:$0xf]
    %v2194 = vld [vmem:[#allocation8 + $0xf4] sm:$0xf]
    %v2195 = vld [vmem:[#allocation8 + $0xf8] sm:$0xf]
    %v2196 = vld [vmem:[#allocation8 + $0xfc] sm:$0xf]
    %v2197 = vld [vmem:[%s4] sm:$0x1]
    %v2199 = vperm.slane %v2197, 0
    %v2265 = vunpack.c.l.b16 %v2133
    %v2266 = vunpack.c.l.b16 %v2134
    %v2267 = vunpack.c.l.b16 %v2135
    %v2268 = vunpack.c.l.b16 %v2136
    %v2269 = vunpack.c.l.b16 %v2137
    %v2270 = vunpack.c.l.b16 %v2138
    %v2271 = vunpack.c.l.b16 %v2139
    %v2272 = vunpack.c.l.b16 %v2140
    %v2273 = vunpack.c.l.b16 %v2141
    %v2274 = vunpack.c.l.b16 %v2142
    %v2275 = vunpack.c.l.b16 %v2143
    %v2276 = vunpack.c.l.b16 %v2144
    %v2277 = vunpack.c.l.b16 %v2145
    %v2278 = vunpack.c.l.b16 %v2146
    %v2279 = vunpack.c.l.b16 %v2147
    %v2280 = vunpack.c.l.b16 %v2148
    %v2281 = vunpack.c.l.b16 %v2149
    %v2282 = vunpack.c.l.b16 %v2150
    %v2283 = vunpack.c.l.b16 %v2151
    %v2284 = vunpack.c.l.b16 %v2152
    %v2285 = vunpack.c.l.b16 %v2153
    %v2286 = vunpack.c.l.b16 %v2154
    %v2287 = vunpack.c.l.b16 %v2155
    %v2288 = vunpack.c.l.b16 %v2156
    %v2289 = vunpack.c.l.b16 %v2157
    %v2290 = vunpack.c.l.b16 %v2158
    %v2291 = vunpack.c.l.b16 %v2159
    %v2292 = vunpack.c.l.b16 %v2160
    %v2293 = vunpack.c.l.b16 %v2161
    %v2294 = vunpack.c.l.b16 %v2162
    %v2295 = vunpack.c.l.b16 %v2163
    %v2296 = vunpack.c.l.b16 %v2164
    %v2297 = vunpack.c.l.b16 %v2165
    %v2298 = vunpack.c.l.b16 %v2166
    %v2299 = vunpack.c.l.b16 %v2167
    %v2300 = vunpack.c.l.b16 %v2168
    %v2301 = vunpack.c.l.b16 %v2169
    %v2302 = vunpack.c.l.b16 %v2170
    %v2303 = vunpack.c.l.b16 %v2171
    %v2304 = vunpack.c.l.b16 %v2172
    %v2305 = vunpack.c.l.b16 %v2173
    %v2306 = vunpack.c.l.b16 %v2174
    %v2307 = vunpack.c.l.b16 %v2175
    %v2308 = vunpack.c.l.b16 %v2176
    %v2309 = vunpack.c.l.b16 %v2177
    %v2310 = vunpack.c.l.b16 %v2178
    %v2311 = vunpack.c.l.b16 %v2179
    %v2312 = vunpack.c.l.b16 %v2180
    %v2313 = vunpack.c.l.b16 %v2181
    %v2314 = vunpack.c.l.b16 %v2182
    %v2315 = vunpack.c.l.b16 %v2183
    %v2316 = vunpack.c.l.b16 %v2184
    %v2317 = vunpack.c.l.b16 %v2185
    %v2318 = vunpack.c.l.b16 %v2186
    %v2319 = vunpack.c.l.b16 %v2187
    %v2320 = vunpack.c.l.b16 %v2188
    %v2321 = vunpack.c.l.b16 %v2189
    %v2322 = vunpack.c.l.b16 %v2190
    %v2323 = vunpack.c.l.b16 %v2191
    %v2324 = vunpack.c.l.b16 %v2192
    %v2325 = vunpack.c.l.b16 %v2193
    %v2326 = vunpack.c.l.b16 %v2194
    %v2327 = vunpack.c.l.b16 %v2195
    %v2328 = vunpack.c.l.b16 %v2196
    %v2329 = vpack.c.b16 %v2266, %v2265
    %v2330 = vpack.c.b16 %v2268, %v2267
    %v2331 = vpack.c.b16 %v2270, %v2269
    %v2332 = vpack.c.b16 %v2272, %v2271
    %v2333 = vpack.c.b16 %v2274, %v2273
    %v2334 = vpack.c.b16 %v2276, %v2275
    %v2335 = vpack.c.b16 %v2278, %v2277
    %v2336 = vpack.c.b16 %v2280, %v2279
    %v2337 = vpack.c.b16 %v2282, %v2281
    %v2338 = vpack.c.b16 %v2284, %v2283
    %v2339 = vpack.c.b16 %v2286, %v2285
    %v2340 = vpack.c.b16 %v2288, %v2287
    %v2341 = vpack.c.b16 %v2290, %v2289
    %v2342 = vpack.c.b16 %v2292, %v2291
    %v2343 = vpack.c.b16 %v2294, %v2293
    %v2344 = vpack.c.b16 %v2296, %v2295
    %v2345 = vpack.c.b16 %v2298, %v2297
    %v2346 = vpack.c.b16 %v2300, %v2299
    %v2347 = vpack.c.b16 %v2302, %v2301
    %v2348 = vpack.c.b16 %v2304, %v2303
    %v2349 = vpack.c.b16 %v2306, %v2305
    %v2350 = vpack.c.b16 %v2308, %v2307
    %v2351 = vpack.c.b16 %v2310, %v2309
    %v2352 = vpack.c.b16 %v2312, %v2311
    %v2353 = vpack.c.b16 %v2314, %v2313
    %v2354 = vpack.c.b16 %v2316, %v2315
    %v2355 = vpack.c.b16 %v2318, %v2317
    %v2356 = vpack.c.b16 %v2320, %v2319
    %v2357 = vpack.c.b16 %v2322, %v2321
    %v2358 = vpack.c.b16 %v2324, %v2323
    %v2359 = vpack.c.b16 %v2326, %v2325
    %v2360 = vpack.c.b16 %v2328, %v2327
    %2393 = vmatpush.bf16.msra.mxu0 %v2336
    %2394 = vmatpush.bf16.msra.mxu0 %v2335
    %2395 = vmatpush.bf16.msra.mxu0 %v2334
    %2396 = vmatpush.bf16.msra.mxu0 %v2333
    %2397 = vmatpush.bf16.msra.mxu0 %v2332
    %2398 = vmatpush.bf16.msra.mxu0 %v2331
    %2399 = vmatpush.bf16.msra.mxu0 %v2330
    %2400 = vmatpush.bf16.msra.mxu0 %v2329
    %2401 = vmatmul.bf16.gmra.mxu0 %v2129
    %v2402 = vpop.f32.mrf.mxu0
    %v2403 = vadd.f32 %v2199, %v2402
    %v2404 = vpop.f32.mrf.mxu0
    %v2405 = vadd.f32 %v2199, %v2404
    %2406 = vdwg.mxu0
    %2407 = vmatpush.bf16.msra.mxu0 %v2344
    %2408 = vmatpush.bf16.msra.mxu0 %v2343
    %2409 = vmatpush.bf16.msra.mxu0 %v2342
    %2410 = vmatpush.bf16.msra.mxu0 %v2341
    %2411 = vmatpush.bf16.msra.mxu0 %v2340
    %2412 = vmatpush.bf16.msra.mxu0 %v2339
    %2413 = vmatpush.bf16.msra.mxu0 %v2338
    %2414 = vmatpush.bf16.msra.mxu0 %v2337
    %2415 = vmatmul.bf16.gmra.mxu0 %v2130
    %v2416 = vpop.f32.mrf.mxu0
    %v2417 = vadd.f32 %v2403, %v2416
    %v2418 = vpop.f32.mrf.mxu0
    %v2419 = vadd.f32 %v2405, %v2418
    %2420 = vdwg.mxu0
    %2421 = vmatpush.bf16.msra.mxu0 %v2352
    %2422 = vmatpush.bf16.msra.mxu0 %v2351
    %2423 = vmatpush.bf16.msra.mxu0 %v2350
    %2424 = vmatpush.bf16.msra.mxu0 %v2349
    %2425 = vmatpush.bf16.msra.mxu0 %v2348
    %2426 = vmatpush.bf16.msra.mxu0 %v2347
    %2427 = vmatpush.bf16.msra.mxu0 %v2346
    %2428 = vmatpush.bf16.msra.mxu0 %v2345
    %2429 = vmatmul.bf16.gmra.mxu0 %v2131
    %v2430 = vpop.f32.mrf.mxu0
    %v2431 = vadd.f32 %v2417, %v2430
    %v2432 = vpop.f32.mrf.mxu0
    %v2433 = vadd.f32 %v2419, %v2432
    %2434 = vdwg.mxu0
    %2435 = vmatpush.bf16.msra.mxu0 %v2360
    %2436 = vmatpush.bf16.msra.mxu0 %v2359
    %2437 = vmatpush.bf16.msra.mxu0 %v2358
    %2438 = vmatpush.bf16.msra.mxu0 %v2357
    %2439 = vmatpush.bf16.msra.mxu0 %v2356
    %2440 = vmatpush.bf16.msra.mxu0 %v2355
    %2441 = vmatpush.bf16.msra.mxu0 %v2354
    %2442 = vmatpush.bf16.msra.mxu0 %v2353
    %2443 = vmatmul.bf16.gmra.mxu0 %v2132
    %v2444 = vpop.f32.mrf.mxu0
    %v2445 = vadd.f32 %v2431, %v2444
    %v2446 = vpop.f32.mrf.mxu0
    %v2447 = vadd.f32 %v2433, %v2446
    %2448 = vdwg.mxu0
    %v2449 = vmax.f32 %v2445, 0.0
    %v2450 = vmax.f32 %v2447, 0.0
    %v2451 = vpack.c.bf16 %v2450, %v2449
    %v2452 = vld [vmem:[#allocation10] sm:$0xf]
    %v2453 = vld [vmem:[#allocation10 + $0x4] sm:$0xf]
    %v2454 = vld [vmem:[#allocation10 + $0x8] sm:$0xf]
    %v2455 = vld [vmem:[#allocation10 + $0xc] sm:$0xf]
    %v2456 = vld [vmem:[#allocation10 + $0x10] sm:$0xf]
    %v2457 = vld [vmem:[#allocation10 + $0x14] sm:$0xf]
    %v2458 = vld [vmem:[#allocation10 + $0x18] sm:$0xf]
    %v2459 = vld [vmem:[#allocation10 + $0x1c] sm:$0xf]
    %v2460 = vld [vmem:[#allocation10 + $0x20] sm:$0xf]
    %v2461 = vld [vmem:[#allocation10 + $0x24] sm:$0xf]
    %v2462 = vld [vmem:[#allocation10 + $0x28] sm:$0xf]
    %v2463 = vld [vmem:[#allocation10 + $0x2c] sm:$0xf]
    %v2464 = vld [vmem:[#allocation10 + $0x30] sm:$0xf]
    %v2465 = vld [vmem:[#allocation10 + $0x34] sm:$0xf]
    %v2466 = vld [vmem:[#allocation10 + $0x38] sm:$0xf]
    %v2467 = vld [vmem:[#allocation10 + $0x3c] sm:$0xf]
    %v2468 = vld [vmem:[%s6] sm:$0x1]
    %v2470 = vperm.slane %v2468, 0
    %v2488 = vunpack.c.l.b16 %v2452
    %v2489 = vunpack.c.l.b16 %v2453
    %v2490 = vunpack.c.l.b16 %v2454
    %v2491 = vunpack.c.l.b16 %v2455
    %v2492 = vunpack.c.l.b16 %v2456
    %v2493 = vunpack.c.l.b16 %v2457
    %v2494 = vunpack.c.l.b16 %v2458
    %v2495 = vunpack.c.l.b16 %v2459
    %v2496 = vunpack.c.l.b16 %v2460
    %v2497 = vunpack.c.l.b16 %v2461
    %v2498 = vunpack.c.l.b16 %v2462
    %v2499 = vunpack.c.l.b16 %v2463
    %v2500 = vunpack.c.l.b16 %v2464
    %v2501 = vunpack.c.l.b16 %v2465
    %v2502 = vunpack.c.l.b16 %v2466
    %v2503 = vunpack.c.l.b16 %v2467
    %v2504 = vpack.c.b16 %v2489, %v2488
    %v2505 = vpack.c.b16 %v2491, %v2490
    %v2506 = vpack.c.b16 %v2493, %v2492
    %v2507 = vpack.c.b16 %v2495, %v2494
    %v2508 = vpack.c.b16 %v2497, %v2496
    %v2509 = vpack.c.b16 %v2499, %v2498
    %v2510 = vpack.c.b16 %v2501, %v2500
    %v2511 = vpack.c.b16 %v2503, %v2502
    %2520 = vmatpush.bf16.msra.mxu0 %v2511
    %2521 = vmatpush.bf16.msra.mxu0 %v2510
    %2522 = vmatpush.bf16.msra.mxu0 %v2509
    %2523 = vmatpush.bf16.msra.mxu0 %v2508
    %2524 = vmatpush.bf16.msra.mxu0 %v2507
    %2525 = vmatpush.bf16.msra.mxu0 %v2506
    %2526 = vmatpush.bf16.msra.mxu0 %v2505
    %2527 = vmatpush.bf16.msra.mxu0 %v2504
    %2528 = vmatmul.bf16.gmra.mxu0 %v2451
    %v2529 = vpop.f32.mrf.mxu0
    %v2530 = vadd.f32 %v2470, %v2529
    %v2531 = vpop.f32.mrf.mxu0
    %v2532 = vadd.f32 %v2470, %v2531
    %2533 = vdwg.mxu0
    %2534 = vst [vmem:[#allocation11] sm:$0xff] %v2530
    %2535 = vst [vmem:[#allocation11 + $0x8] sm:$0xff] %v2532
    // Predicated region
    $region50: #{tpu_custom_call.1} parent=1 // pred_check
      _
    $region51: #{tpu_custom_call.1} parent=1 // pred_check_branch
      %2537 = sbr.rel (0) target = $region53
    $region52: #{tpu_custom_call.1} parent=1 // pred_region
      %2539 = vsyncadd [#allocation4], 0
      %s2540 = sshll.u32 [#allocation11], 4
      %s2541 = int_to_ptr.vmem [resolvable:$true] %s2540
      %s2542 = sshll.u32 %s7, 4
      %s2543 = int_to_ptr.hbm [resolvable:$true] %s2542
      %2548 = dma.vmem_to_hbm [thread:$0]  %s2541, 256, %s2543, [#allocation4], 128, 128, 8
    $region53: #{tpu_custom_call.1} parent=1 // pred_fallthru
      _
    // Predicated region
    $region54: #{tpu_custom_call.1} parent=1 // pred_check
      _
    $region55: #{tpu_custom_call.1} parent=1 // pred_check_branch
      %2550 = sbr.rel (0) target = $region57
    $region56: #{tpu_custom_call.1} parent=1 // pred_region
      %2552 = dma.done [#allocation4], 256
    $region57: #{tpu_custom_call.1} parent=1 // pred_fallthru
      _
    %2553 = vsyncpa [#allocation3], 1
    %2554 = vsyncpa [#allocation6], 1
    %2555 = vsyncpa [#allocation9], 1
    %2556 = vsyncpa [#allocation4], 1

</llo_original>
